<compile_context>
chip_gen: v5e
topology: v5e:2x2
jax: 0.10.0
libtpu: 0.0.40
codegen_flags: <defaults>
</compile_context>

<pallas_src>
import math

import jax
import jax.numpy as jnp
from jax.experimental import pallas as pl
from jax.experimental.pallas import tpu as pltpu


def make_divisible(value, divisor, min_value=None, round_down_protect=True):
    if min_value is None:
        min_value = divisor
    new_value = max(min_value, int(value + divisor / 2) // divisor * divisor)
    if round_down_protect and new_value < 0.9 * value:
        new_value += divisor
    return new_value


def _conv_out(n, k, s, p):
    return (n + 2 * p - k) // s + 1


def _pick_divisor(n, target):
    t = max(1, min(int(target), n))
    while n % t:
        t -= 1
    return t


def _vmem_cap_bytes():
    """0.8 * physical VMEM of the attached chip; conservative fallback if unavailable."""
    try:
        info = pltpu.get_tpu_info()
        cap = getattr(info, "vmem_capacity_bytes", None)
        if cap:
            return int(0.8 * int(cap))
    except Exception:
        pass
    return 48 * 1024 * 1024  # safe on v7x's 64 MiB physical VMEM (and on v5e/v6e)


def _tree_sum(vals):
    """Balanced-tree reduction of a list of arrays (relieves the vst slot vs serial RMW)."""
    vals = list(vals)
    while len(vals) > 1:
        nxt = [vals[i] + vals[i + 1] for i in range(0, len(vals) - 1, 2)]
        if len(vals) % 2:
            nxt.append(vals[-1])
        vals = nxt
    return vals[0]


# ----------------------------------------------------------------------------
# Fused UIB kernel builder (one (batch n, output-row-tile t) grid step per call)
# ----------------------------------------------------------------------------
def _build_uib_kernel(*, has_start, k1, s1, p1, PT, PCL, W, Cin, H1, W1,
                      has_mid, relu_mid, k2, s2, p2, PL2, Cexp,
                      W_out, Cout, TH, TH_mid, identity, mm_dtype):
    f32 = jnp.float32

    def kernel(*refs):
        it = iter(refs)
        x_ref = next(it)                          # (Hp, Wp, Cin) padded image, batch n
        if has_start:
            sdw_w_ref = next(it)                  # (k1*k1, Cin)  f32, BN scale folded
            sdw_b_ref = next(it)                  # (1, Cin)      f32
        exp_w_ref = next(it)                      # (Cin, Cexp)   mm dtype, BN scale folded
        exp_b_ref = next(it)                      # (1, Cexp)     f32
        if has_mid:
            mid_w_ref = next(it)                  # (k2*k2, Cexp) f32, BN scale folded
            mid_b_ref = next(it)                  # (1, Cexp)     f32
        proj_w_ref = next(it)                     # (Cexp, Cout)  mm dtype, BN*gamma folded
        proj_b_ref = next(it)                     # (1, Cout)     f32 (gamma folded)
        o_ref = next(it)                          # (TH, W_out, Cout)
        xe_ref = next(it) if has_mid else None    # (TH_mid, PL2+W1+p2, Cexp) mm dtype

        t = pl.program_id(1)
        oh0 = pl.multiple_of(t * TH, TH)          # first output row of this tile
        i0 = oh0 * (s2 * s1)                      # first padded-input row this tile reads
        e_lo = oh0 * s2 - p2                      # first expanded-map row (may be < 0)

        # ---- start DW (+ folded BN scale) for the TH_mid expanded rows of this tile ----
        if has_start:
            taps = []
            for dy in range(k1):
                for dx in range(k1):
                    if s1 == 1:
                        patch = x_ref[pl.ds(i0 + dy, TH_mid), dx:dx + W1, :]
                    else:
                        patch = x_ref[pl.ds(i0 + dy, TH_mid, stride=s1),
                                      pl.ds(dx, W1, stride=s1), :]
                    taps.append(patch.astype(f32) * sdw_w_ref[dy * k1 + dx, :])
            xs = _tree_sum(taps) + sdw_b_ref[0, :]        # BN bias, no activation
            xs_mm = xs.astype(mm_dtype)
        else:
            xs_mm = x_ref[pl.ds(i0, TH_mid), PCL:PCL + W1, :].astype(mm_dtype)

        # ---- 1x1 expand (MXU, f32 accumulation) + BN bias + ReLU ----------------------
        xe = jnp.dot(xs_mm.reshape(TH_mid * W1, Cin), exp_w_ref[...],
                     preferred_element_type=f32)
        xe = jnp.maximum(xe + exp_b_ref[0, :], 0.0).reshape(TH_mid, W1, Cexp)

        if has_mid:
            if p2 > 0:
                # rows outside [0, H1) are the middle-DW zero padding: mask post-expand
                rr = jax.lax.broadcasted_iota(jnp.int32, (TH_mid, 1, 1), 0) + e_lo
                xe = jnp.where((rr >= 0) & (rr < H1), xe, 0.0)
                # zero the column halos of the per-tile scratch (left pad is 8-aligned)
                xe_ref[:, 0:PL2, :] = jnp.zeros((TH_mid, PL2, Cexp), mm_dtype)
                xe_ref[:, PL2 + W1:, :] = jnp.zeros((TH_mid, p2, Cexp), mm_dtype)
            # aligned bulk write of the expanded tile (mm dtype -> halves DW load bytes)
            xe_ref[:, PL2:PL2 + W1, :] = xe.astype(mm_dtype)

            # ---- middle DW (+ folded BN scale) + BN bias + ReLU ------------------------
            taps = []
            for dy in range(k2):
                for dx in range(k2):
                    c0 = PL2 - p2 + dx
                    if s2 == 1:
                        patch = xe_ref[dy:dy + TH, c0:c0 + W_out, :]
                    else:
                        patch = xe_ref[pl.ds(dy, TH, stride=s2),
                                       pl.ds(c0, W_out, stride=s2), :]
                    taps.append(patch.astype(f32) * mid_w_ref[dy * k2 + dx, :])
            y = _tree_sum(taps) + mid_b_ref[0, :]
            if relu_mid:
                y = jnp.maximum(y, 0.0)
        else:
            y = xe                                        # (TH, W_out, Cexp); TH_mid == TH

        # ---- 1x1 project (MXU) + folded BN/gamma bias + residual ----------------------
        out = jnp.dot(y.reshape(TH * W_out, Cexp).astype(mm_dtype), proj_w_ref[...],
                      preferred_element_type=f32)
        out = (out + proj_b_ref[0, :]).reshape(TH, W_out, Cout)
        if identity:
            # residual from the already-resident (padded) input block
            out = out + x_ref[pl.ds(oh0 + PT, TH), PCL:PCL + W, :].astype(f32)
        o_ref[...] = out.astype(o_ref.dtype)

    return kernel


# ----------------------------------------------------------------------------
# NHWC wrapper (single pallas_call for the whole UIB block)
# ----------------------------------------------------------------------------
def universal_inverted_bottleneck_nhwc(x, params, *, in_channels, out_channels,
                                       start_dw_kernel_size, middle_dw_kernel_size,
                                       stride, middle_dw_downsample=True,
                                       use_layer_scale=False, row_tile=64,
                                       use_bf16_mm=True):
    N, H, W, Cin = x.shape
    assert Cin == in_channels
    dtype = x.dtype
    f32 = jnp.float32
    mm_dtype = jnp.bfloat16 if (use_bf16_mm or dtype == jnp.bfloat16) else f32

    has_start = bool(start_dw_kernel_size)
    has_mid = bool(middle_dw_kernel_size)

    if has_start:
        k1 = int(start_dw_kernel_size)
        s1 = 1 if middle_dw_downsample else int(stride)
        p1 = (k1 - 1) // 2
        H1, W1 = _conv_out(H, k1, s1, p1), _conv_out(W, k1, s1, p1)
    else:
        k1, s1, p1, H1, W1 = 0, 1, 0, H, W

    Cexp = int(params["expand_w"].shape[1])
    Cout = int(out_channels)

    if has_mid:
        k2 = int(middle_dw_kernel_size)
        s2 = int(stride) if middle_dw_downsample else 1
        p2 = (k2 - 1) // 2
        relu_mid = True
    else:
        k2, s2, p2, relu_mid = 1, 1, 0, False

    H_out, W_out = _conv_out(H1, k2, s2, p2), _conv_out(W1, k2, s2, p2)
    identity = (stride == 1) and (in_channels == out_channels)

    TH = _pick_divisor(H_out, row_tile)       # output-row tile (exact divisor)
    T = H_out // TH
    TH_mid = (TH - 1) * s2 + k2               # expanded rows needed per output-row tile

    PT = p1 + p2 * s1                         # top/bottom row pad of the input
    PCL = p1                                  # left/right col pad of the input
    PL2 = 8 if (has_mid and p2 > 0) else 0    # 8-aligned left col pad of the xe scratch

    # Pre-pad the (cheap, Cin-wide) input once in the wrapper: the start-DW zero padding
    # (p1) becomes exact zeros, and the extra rows only feed expanded rows that the kernel
    # masks to zero before the middle DW, so all in-kernel reads are in-bounds.
    x_pad = jnp.pad(x, ((0, 0), (PT, PT), (PCL, PCL), (0, 0)))
    Hp, Wp = H + 2 * PT, W + 2 * PCL

    # ------------------------------ operands / specs (BN scales folded) ---------------
    inputs, in_specs = [], []

    def add_full(arr):
        arr = jnp.asarray(arr)
        inputs.append(arr)
        in_specs.append(pl.BlockSpec(arr.shape, lambda n, t: (0, 0)))

    inputs.append(x_pad)
    in_specs.append(pl.BlockSpec((None, Hp, Wp, Cin), lambda n, t: (n, 0, 0, 0)))

    if has_start:
        sdw_w = params["start_dw_w"].astype(f32) * params["start_dw_scale"].astype(f32)[None, :]
        add_full(sdw_w)
        add_full(params["start_dw_bias"].reshape(1, Cin).astype(f32))

    exp_w = params["expand_w"].astype(f32) * params["expand_scale"].astype(f32)[None, :]
    add_full(exp_w.astype(mm_dtype))
    add_full(params["expand_bias"].reshape(1, Cexp).astype(f32))

    if has_mid:
        mid_w = params["mid_dw_w"].astype(f32) * params["mid_dw_scale"].astype(f32)[None, :]
        add_full(mid_w)
        add_full(params["mid_dw_bias"].reshape(1, Cexp).astype(f32))

    gamma = params["gamma"].astype(f32) if use_layer_scale else jnp.ones((Cout,), f32)
    proj_w = params["proj_w"].astype(f32) * (params["proj_scale"].astype(f32) * gamma)[None, :]
    add_full(proj_w.astype(mm_dtype))
    add_full((params["proj_bias"].astype(f32) * gamma).reshape(1, Cout))

    scratch_shapes = []
    if has_mid:
        scratch_shapes.append(pltpu.VMEM((TH_mid, PL2 + W1 + p2, Cexp), mm_dtype))

    kernel = _build_uib_kernel(
        has_start=has_start, k1=k1, s1=s1, p1=p1, PT=PT, PCL=PCL, W=W, Cin=Cin,
        H1=H1, W1=W1, has_mid=has_mid, relu_mid=relu_mid, k2=k2, s2=s2, p2=p2,
        PL2=PL2, Cexp=Cexp, W_out=W_out, Cout=Cout, TH=TH, TH_mid=TH_mid,
        identity=identity, mm_dtype=mm_dtype)

    # VMEM budget: double-buffered blocks + per-tile scratch + f32 in-step intermediates,
    # capped at ~0.8 * the chip's physical VMEM (v7x-safe, roomy on v5e/v6e).
    itemsize = jnp.dtype(dtype).itemsize
    mm_itemsize = jnp.dtype(mm_dtype).itemsize
    in_block = Hp * Wp * Cin * itemsize
    out_tile = TH * W_out * Cout * itemsize
    weight_bytes = sum(int(a.size) * a.dtype.itemsize for a in inputs[1:])
    scratch_bytes = (TH_mid * (PL2 + W1 + p2) * Cexp * mm_itemsize) if has_mid else 0
    inter_bytes = 4 * (max(k1 * k1, 1) * TH_mid * W1 * Cin
                       + TH_mid * W1 * Cexp
                       + (k2 * k2 * TH * W_out * Cexp if has_mid else 0)
                       + TH * W_out * Cout)
    need = scratch_bytes + inter_bytes + 2 * (in_block + out_tile + weight_bytes)
    vmem_limit = int(min(max(int(1.5 * need), 16 * 1024 * 1024), _vmem_cap_bytes()))

    out = pl.pallas_call(
        kernel,
        out_shape=jax.ShapeDtypeStruct((N, H_out, W_out, Cout), dtype),
        grid=(N, T),
        in_specs=in_specs,
        out_specs=pl.BlockSpec((None, TH, W_out, Cout), lambda n, t: (n, t, 0, 0)),
        scratch_shapes=scratch_shapes,
        compiler_params=pltpu.CompilerParams(
            dimension_semantics=("parallel", "parallel"),
            vmem_limit_bytes=vmem_limit),
    )(*inputs)
    return out


# ----------------------------------------------------------------------------
# NCHW public wrapper (PyTorch layout).  NHWC callers can use the NHWC entry point.
# ----------------------------------------------------------------------------
def universal_inverted_bottleneck(x_nchw, params, *, in_channels, out_channels,
                                  start_dw_kernel_size, middle_dw_kernel_size,
                                  stride, middle_dw_downsample=True,
                                  use_layer_scale=False, row_tile=64,
                                  use_bf16_mm=True):
    x = jnp.transpose(x_nchw, (0, 2, 3, 1))  # NCHW -> NHWC
    y = universal_inverted_bottleneck_nhwc(
        x, params, in_channels=in_channels, out_channels=out_channels,
        start_dw_kernel_size=start_dw_kernel_size,
        middle_dw_kernel_size=middle_dw_kernel_size, stride=stride,
        middle_dw_downsample=middle_dw_downsample,
        use_layer_scale=use_layer_scale, row_tile=row_tile,
        use_bf16_mm=use_bf16_mm)
    return jnp.transpose(y, (0, 3, 1, 2))    # NHWC -> NCHW


# ----------------------------------------------------------------------------
# Pure-JAX reference (lax conv, NCHW) for correctness checking
# ----------------------------------------------------------------------------
def _ref_forward(x, params, *, in_channels, out_channels, start_dw_kernel_size,
                 middle_dw_kernel_size, stride, middle_dw_downsample,
                 use_layer_scale):
    def dw(x, w_kk_c, scale, bias, s, relu):
        C = x.shape[1]
        k = int(math.isqrt(w_kk_c.shape[0]))
        w = jnp.transpose(w_kk_c.reshape(k, k, C), (2, 0, 1))[:, None]  # (C,1,k,k)
        p = (k - 1) // 2
        y = jax.lax.conv_general_dilated(x, w, (s, s), [(p, p), (p, p)],
                                         feature_group_count=C)
        y = y * scale[None, :, None, None] + bias[None, :, None, None]
        return jnp.maximum(y, 0.0) if relu else y

    def pw(x, w_io, scale, bias, relu):
        w = jnp.transpose(w_io, (1, 0))[:, :, None, None]  # (Cout,Cin,1,1)
        y = jax.lax.conv_general_dilated(x, w, (1, 1), [(0, 0), (0, 0)])
        y = y * scale[None, :, None, None] + bias[None, :, None, None]
        return jnp.maximum(y, 0.0) if relu else y

    shortcut = x
    if start_dw_kernel_size:
        s = 1 if middle_dw_downsample else stride
        x = dw(x, params["start_dw_w"], params["start_dw_scale"],
               params["start_dw_bias"], s, False)
    x = pw(x, params["expand_w"], params["expand_scale"], params["expand_bias"], True)
    if middle_dw_kernel_size:
        s = stride if middle_dw_downsample else 1
        x = dw(x, params["mid_dw_w"], params["mid_dw_scale"],
               params["mid_dw_bias"], s, True)
    x = pw(x, params["proj_w"], params["proj_scale"], params["proj_bias"], False)
    if use_layer_scale:
        x = x * params["gamma"][None, :, None, None]
    if stride == 1 and in_channels == out_channels:
        x = x + shortcut
    return x


def _fold_bn(key, c, eps=1e-5):
    k1, k2, k3, k4 = jax.random.split(key, 4)
    weight = 1.0 + 0.1 * jax.random.normal(k1, (c,), jnp.float32)
    bias = 0.1 * jax.random.normal(k2, (c,), jnp.float32)
    running_mean = 0.1 * jax.random.normal(k3, (c,), jnp.float32)
    running_var = 1.0 + 0.1 * jnp.abs(jax.random.normal(k4, (c,), jnp.float32))
    scale = weight / jnp.sqrt(running_var + eps)
    return scale, bias - running_mean * scale


def _build_params(key, Cin, Cout, Cexp, start_k, mid_k):
    keys = jax.random.split(key, 9)
    params = {
        "expand_w": 0.2 * jax.random.normal(keys[0], (Cin, Cexp), jnp.float32),
        "proj_w": 0.2 * jax.random.normal(keys[1], (Cexp, Cout), jnp.float32),
        # non-trivial gamma so the layer-scale path is actually checked
        # (PyTorch init would be layer_scale_init_value = 1e-5)
        "gamma": 0.7 + 0.1 * jax.random.normal(keys[2], (Cout,), jnp.float32),
    }
    params["expand_scale"], params["expand_bias"] = _fold_bn(keys[3], Cexp)
    params["proj_scale"], params["proj_bias"] = _fold_bn(keys[4], Cout)
    if start_k:
        params["start_dw_w"] = 0.2 * jax.random.normal(
            keys[5], (start_k * start_k, Cin), jnp.float32)
        params["start_dw_scale"], params["start_dw_bias"] = _fold_bn(keys[6], Cin)
    if mid_k:
        params["mid_dw_w"] = 0.2 * jax.random.normal(
            keys[7], (mid_k * mid_k, Cexp), jnp.float32)
        params["mid_dw_scale"], params["mid_dw_bias"] = _fold_bn(keys[8], Cexp)
    return params


if __name__ == "__main__":
    key = jax.random.PRNGKey(0)
    k_p1, k_p2, k_x1, k_x2 = jax.random.split(key, 4)

    N, Cin, H, W = 2, 16, 16, 16

    # --- config 1: start-DW 3x3 + mid-DW 3x3, residual + layer scale ---
    Cout1 = 16
    Cexp1 = make_divisible(int(Cin * 4.0), 8)
    cfg1 = dict(in_channels=Cin, out_channels=Cout1, start_dw_kernel_size=3,
                middle_dw_kernel_size=3, stride=1, middle_dw_downsample=True,
                use_layer_scale=True)
    params1 = _build_params(k_p1, Cin, Cout1, Cexp1, 3, 3)
    x1 = jax.random.normal(k_x1, (N, Cin, H, W), jnp.float32)
    ref1 = _ref_forward(x1, params1, **cfg1)

    # exact f32 matmul path (use_bf16_mm=False) -> tight tolerance
    out1 = jax.block_until_ready(universal_inverted_bottleneck(
        x1, params1, row_tile=8, use_bf16_mm=False, **cfg1))
    assert out1.shape == ref1.shape == (N, Cout1, H, W)
    assert jnp.allclose(out1, ref1, atol=1e-3, rtol=1e-3), \
        f"cfg1 (f32) max abs diff {jnp.max(jnp.abs(out1 - ref1))}"

    # default perf path: bf16 MXU operands, f32 accumulation -> inference tolerance
    out1p = jax.block_until_ready(universal_inverted_bottleneck(
        x1, params1, row_tile=8, **cfg1))
    assert jnp.allclose(out1p, ref1, atol=1e-1, rtol=1e-1), \
        f"cfg1 (bf16 mm) max abs diff {jnp.max(jnp.abs(out1p - ref1))}"

    # --- config 2: no start DW, 5x5 mid DW, no residual / no layer scale ---
    Cout2 = 24
    Cexp2 = make_divisible(int(Cin * 2.0), 8)
    cfg2 = dict(in_channels=Cin, out_channels=Cout2, start_dw_kernel_size=0,
                middle_dw_kernel_size=5, stride=1, middle_dw_downsample=True,
                use_layer_scale=False)
    params2 = _build_params(k_p2, Cin, Cout2, Cexp2, 0, 5)
    x2 = jax.random.normal(k_x2, (N, Cin, H, W), jnp.float32)
    ref2 = _ref_forward(x2, params2, **cfg2)

    out2 = jax.block_until_ready(universal_inverted_bottleneck(
        x2, params2, row_tile=16, use_bf16_mm=False, **cfg2))
    assert out2.shape == ref2.shape == (N, Cout2, H, W)
    assert jnp.allclose(out2, ref2, atol=1e-3, rtol=1e-3), \
        f"cfg2 max abs diff {jnp.max(jnp.abs(out2 - ref2))}"

    # --- config 1 again with bf16 inputs (bf16 DMA/MXU, f32 accumulation) ---
    out1b = jax.block_until_ready(universal_inverted_bottleneck(
        x1.astype(jnp.bfloat16), params1, row_tile=8, **cfg1))
    assert out1b.dtype == jnp.bfloat16 and out1b.shape == ref1.shape
    assert jnp.allclose(out1b.astype(jnp.float32), ref1, atol=1e-1, rtol=1e-1), \
        f"bf16 max abs diff {jnp.max(jnp.abs(out1b.astype(jnp.float32) - ref1))}"

    print("KERNEL_OK")
</pallas_src>

<mosaic_0001>
module attributes {stable_mosaic.version = 11 : i64} {
  func.func @kernel(%arg0: i32, %arg1: i32, %arg2: memref<1x20x18x16xf32, #tpu.memory_space<vmem>>, %arg3: memref<9x16xf32, #tpu.memory_space<vmem>>, %arg4: memref<1x16xf32, #tpu.memory_space<vmem>>, %arg5: memref<16x64xf32, #tpu.memory_space<vmem>>, %arg6: memref<1x64xf32, #tpu.memory_space<vmem>>, %arg7: memref<9x64xf32, #tpu.memory_space<vmem>>, %arg8: memref<1x64xf32, #tpu.memory_space<vmem>>, %arg9: memref<64x16xf32, #tpu.memory_space<vmem>>, %arg10: memref<1x16xf32, #tpu.memory_space<vmem>>, %arg11: memref<1x8x16x16xf32, #tpu.memory_space<vmem>>, %arg12: memref<10x25x64xf32, #tpu.memory_space<vmem>>) attributes {dimension_semantics = [#tpu.dimension_semantics<parallel>, #tpu.dimension_semantics<parallel>], iteration_bounds = array<i64: 2, 2>, scalar_prefetch = 0 : i64, scratch_operands = 1 : i64, tpu.core_type = #tpu.core_type<tc>, window_params = [{transform_indices = @transform_0, window_bounds = array<i64: 1, 20, 18, 16>}, {pipeline_mode = #tpu.pipeline_mode<synchronous>, transform_indices = @transform_1, window_bounds = array<i64: 9, 16>}, {pipeline_mode = #tpu.pipeline_mode<synchronous>, transform_indices = @transform_2, window_bounds = array<i64: 1, 16>}, {pipeline_mode = #tpu.pipeline_mode<synchronous>, transform_indices = @transform_3, window_bounds = array<i64: 16, 64>}, {pipeline_mode = #tpu.pipeline_mode<synchronous>, transform_indices = @transform_4, window_bounds = array<i64: 1, 64>}, {pipeline_mode = #tpu.pipeline_mode<synchronous>, transform_indices = @transform_5, window_bounds = array<i64: 9, 64>}, {pipeline_mode = #tpu.pipeline_mode<synchronous>, transform_indices = @transform_6, window_bounds = array<i64: 1, 64>}, {pipeline_mode = #tpu.pipeline_mode<synchronous>, transform_indices = @transform_7, window_bounds = array<i64: 64, 16>}, {pipeline_mode = #tpu.pipeline_mode<synchronous>, transform_indices = @transform_8, window_bounds = array<i64: 1, 16>}, {transform_indices = @transform_9, window_bounds = array<i64: 1, 8, 16, 16>}]} {
    %c8_i32 = arith.constant 8 : i32
    %0 = arith.muli %arg1, %c8_i32 : i32
    %1 = tpu.assume_multiple %0, 8 : i32
    %c1_i32 = arith.constant 1 : i32
    %2 = arith.muli %1, %c1_i32 : i32
    %c1_i32_0 = arith.constant 1 : i32
    %3 = arith.muli %1, %c1_i32_0 : i32
    %c1_i32_1 = arith.constant 1 : i32
    %4 = arith.subi %3, %c1_i32_1 : i32
    %c0_i32 = arith.constant 0 : i32
    %5 = arith.addi %2, %c0_i32 : i32
    %c0 = arith.constant 0 : index
    %6 = arith.index_cast %5 : i32 to index
    %c0_2 = arith.constant 0 : index
    %c0_3 = arith.constant 0 : index
    %7 = vector.load %arg2[%c0, %6, %c0_2, %c0_3] : memref<1x20x18x16xf32, #tpu.memory_space<vmem>>, vector<1x10x16x16xf32>
    %8 = vector.shape_cast %7 : vector<1x10x16x16xf32> to vector<10x16x16xf32>
    %c0_4 = arith.constant 0 : index
    %c0_5 = arith.constant 0 : index
    %9 = vector.load %arg3[%c0_4, %c0_5] : memref<9x16xf32, #tpu.memory_space<vmem>>, vector<1x16xf32>
    %10 = vector.shape_cast %9 : vector<1x16xf32> to vector<16xf32>
    %11 = vector.shape_cast %10 : vector<16xf32> to vector<1x1x16xf32>
    %12 = vector.broadcast %11 : vector<1x1x16xf32> to vector<10x16x16xf32>
    %13 = arith.mulf %8, %12 : vector<10x16x16xf32>
    %c0_i32_6 = arith.constant 0 : i32
    %14 = arith.addi %2, %c0_i32_6 : i32
    %c0_7 = arith.constant 0 : index
    %15 = arith.index_cast %14 : i32 to index
    %c1 = arith.constant 1 : index
    %c0_8 = arith.constant 0 : index
    %16 = vector.load %arg2[%c0_7, %15, %c1, %c0_8] : memref<1x20x18x16xf32, #tpu.memory_space<vmem>>, vector<1x10x16x16xf32>
    %17 = vector.shape_cast %16 : vector<1x10x16x16xf32> to vector<10x16x16xf32>
    %c1_9 = arith.constant 1 : index
    %c0_10 = arith.constant 0 : index
    %18 = vector.load %arg3[%c1_9, %c0_10] : memref<9x16xf32, #tpu.memory_space<vmem>>, vector<1x16xf32>
    %19 = vector.shape_cast %18 : vector<1x16xf32> to vector<16xf32>
    %20 = vector.shape_cast %19 : vector<16xf32> to vector<1x1x16xf32>
    %21 = vector.broadcast %20 : vector<1x1x16xf32> to vector<10x16x16xf32>
    %22 = arith.mulf %17, %21 : vector<10x16x16xf32>
    %c0_i32_11 = arith.constant 0 : i32
    %23 = arith.addi %2, %c0_i32_11 : i32
    %c0_12 = arith.constant 0 : index
    %24 = arith.index_cast %23 : i32 to index
    %c2 = arith.constant 2 : index
    %c0_13 = arith.constant 0 : index
    %25 = vector.load %arg2[%c0_12, %24, %c2, %c0_13] : memref<1x20x18x16xf32, #tpu.memory_space<vmem>>, vector<1x10x16x16xf32>
    %26 = vector.shape_cast %25 : vector<1x10x16x16xf32> to vector<10x16x16xf32>
    %c2_14 = arith.constant 2 : index
    %c0_15 = arith.constant 0 : index
    %27 = vector.load %arg3[%c2_14, %c0_15] : memref<9x16xf32, #tpu.memory_space<vmem>>, vector<1x16xf32>
    %28 = vector.shape_cast %27 : vector<1x16xf32> to vector<16xf32>
    %29 = vector.shape_cast %28 : vector<16xf32> to vector<1x1x16xf32>
    %30 = vector.broadcast %29 : vector<1x1x16xf32> to vector<10x16x16xf32>
    %31 = arith.mulf %26, %30 : vector<10x16x16xf32>
    %c1_i32_16 = arith.constant 1 : i32
    %32 = arith.addi %2, %c1_i32_16 : i32
    %c0_17 = arith.constant 0 : index
    %33 = arith.index_cast %32 : i32 to index
    %c0_18 = arith.constant 0 : index
    %c0_19 = arith.constant 0 : index
    %34 = vector.load %arg2[%c0_17, %33, %c0_18, %c0_19] : memref<1x20x18x16xf32, #tpu.memory_space<vmem>>, vector<1x10x16x16xf32>
    %35 = vector.shape_cast %34 : vector<1x10x16x16xf32> to vector<10x16x16xf32>
    %c3 = arith.constant 3 : index
    %c0_20 = arith.constant 0 : index
    %36 = vector.load %arg3[%c3, %c0_20] : memref<9x16xf32, #tpu.memory_space<vmem>>, vector<1x16xf32>
    %37 = vector.shape_cast %36 : vector<1x16xf32> to vector<16xf32>
    %38 = vector.shape_cast %37 : vector<16xf32> to vector<1x1x16xf32>
    %39 = vector.broadcast %38 : vector<1x1x16xf32> to vector<10x16x16xf32>
    %40 = arith.mulf %35, %39 : vector<10x16x16xf32>
    %c1_i32_21 = arith.constant 1 : i32
    %41 = arith.addi %2, %c1_i32_21 : i32
    %c0_22 = arith.constant 0 : index
    %42 = arith.index_cast %41 : i32 to index
    %c1_23 = arith.constant 1 : index
    %c0_24 = arith.constant 0 : index
    %43 = vector.load %arg2[%c0_22, %42, %c1_23, %c0_24] : memref<1x20x18x16xf32, #tpu.memory_space<vmem>>, vector<1x10x16x16xf32>
    %44 = vector.shape_cast %43 : vector<1x10x16x16xf32> to vector<10x16x16xf32>
    %c4 = arith.constant 4 : index
    %c0_25 = arith.constant 0 : index
    %45 = vector.load %arg3[%c4, %c0_25] : memref<9x16xf32, #tpu.memory_space<vmem>>, vector<1x16xf32>
    %46 = vector.shape_cast %45 : vector<1x16xf32> to vector<16xf32>
    %47 = vector.shape_cast %46 : vector<16xf32> to vector<1x1x16xf32>
    %48 = vector.broadcast %47 : vector<1x1x16xf32> to vector<10x16x16xf32>
    %49 = arith.mulf %44, %48 : vector<10x16x16xf32>
    %c1_i32_26 = arith.constant 1 : i32
    %50 = arith.addi %2, %c1_i32_26 : i32
    %c0_27 = arith.constant 0 : index
    %51 = arith.index_cast %50 : i32 to index
    %c2_28 = arith.constant 2 : index
    %c0_29 = arith.constant 0 : index
    %52 = vector.load %arg2[%c0_27, %51, %c2_28, %c0_29] : memref<1x20x18x16xf32, #tpu.memory_space<vmem>>, vector<1x10x16x16xf32>
    %53 = vector.shape_cast %52 : vector<1x10x16x16xf32> to vector<10x16x16xf32>
    %c5 = arith.constant 5 : index
    %c0_30 = arith.constant 0 : index
    %54 = vector.load %arg3[%c5, %c0_30] : memref<9x16xf32, #tpu.memory_space<vmem>>, vector<1x16xf32>
    %55 = vector.shape_cast %54 : vector<1x16xf32> to vector<16xf32>
    %56 = vector.shape_cast %55 : vector<16xf32> to vector<1x1x16xf32>
    %57 = vector.broadcast %56 : vector<1x1x16xf32> to vector<10x16x16xf32>
    %58 = arith.mulf %53, %57 : vector<10x16x16xf32>
    %c2_i32 = arith.constant 2 : i32
    %59 = arith.addi %2, %c2_i32 : i32
    %c0_31 = arith.constant 0 : index
    %60 = arith.index_cast %59 : i32 to index
    %c0_32 = arith.constant 0 : index
    %c0_33 = arith.constant 0 : index
    %61 = vector.load %arg2[%c0_31, %60, %c0_32, %c0_33] : memref<1x20x18x16xf32, #tpu.memory_space<vmem>>, vector<1x10x16x16xf32>
    %62 = vector.shape_cast %61 : vector<1x10x16x16xf32> to vector<10x16x16xf32>
    %c6 = arith.constant 6 : index
    %c0_34 = arith.constant 0 : index
    %63 = vector.load %arg3[%c6, %c0_34] : memref<9x16xf32, #tpu.memory_space<vmem>>, vector<1x16xf32>
    %64 = vector.shape_cast %63 : vector<1x16xf32> to vector<16xf32>
    %65 = vector.shape_cast %64 : vector<16xf32> to vector<1x1x16xf32>
    %66 = vector.broadcast %65 : vector<1x1x16xf32> to vector<10x16x16xf32>
    %67 = arith.mulf %62, %66 : vector<10x16x16xf32>
    %c2_i32_35 = arith.constant 2 : i32
    %68 = arith.addi %2, %c2_i32_35 : i32
    %c0_36 = arith.constant 0 : index
    %69 = arith.index_cast %68 : i32 to index
    %c1_37 = arith.constant 1 : index
    %c0_38 = arith.constant 0 : index
    %70 = vector.load %arg2[%c0_36, %69, %c1_37, %c0_38] : memref<1x20x18x16xf32, #tpu.memory_space<vmem>>, vector<1x10x16x16xf32>
    %71 = vector.shape_cast %70 : vector<1x10x16x16xf32> to vector<10x16x16xf32>
    %c7 = arith.constant 7 : index
    %c0_39 = arith.constant 0 : index
    %72 = vector.load %arg3[%c7, %c0_39] : memref<9x16xf32, #tpu.memory_space<vmem>>, vector<1x16xf32>
    %73 = vector.shape_cast %72 : vector<1x16xf32> to vector<16xf32>
    %74 = vector.shape_cast %73 : vector<16xf32> to vector<1x1x16xf32>
    %75 = vector.broadcast %74 : vector<1x1x16xf32> to vector<10x16x16xf32>
    %76 = arith.mulf %71, %75 : vector<10x16x16xf32>
    %c2_i32_40 = arith.constant 2 : i32
    %77 = arith.addi %2, %c2_i32_40 : i32
    %c0_41 = arith.constant 0 : index
    %78 = arith.index_cast %77 : i32 to index
    %c2_42 = arith.constant 2 : index
    %c0_43 = arith.constant 0 : index
    %79 = vector.load %arg2[%c0_41, %78, %c2_42, %c0_43] : memref<1x20x18x16xf32, #tpu.memory_space<vmem>>, vector<1x10x16x16xf32>
    %80 = vector.shape_cast %79 : vector<1x10x16x16xf32> to vector<10x16x16xf32>
    %c8 = arith.constant 8 : index
    %c0_44 = arith.constant 0 : index
    %81 = vector.load %arg3[%c8, %c0_44] : memref<9x16xf32, #tpu.memory_space<vmem>>, vector<1x16xf32>
    %82 = vector.shape_cast %81 : vector<1x16xf32> to vector<16xf32>
    %83 = vector.shape_cast %82 : vector<16xf32> to vector<1x1x16xf32>
    %84 = vector.broadcast %83 : vector<1x1x16xf32> to vector<10x16x16xf32>
    %85 = arith.mulf %80, %84 : vector<10x16x16xf32>
    %86 = arith.addf %13, %22 : vector<10x16x16xf32>
    %87 = arith.addf %31, %40 : vector<10x16x16xf32>
    %88 = arith.addf %49, %58 : vector<10x16x16xf32>
    %89 = arith.addf %67, %76 : vector<10x16x16xf32>
    %90 = arith.addf %86, %87 : vector<10x16x16xf32>
    %91 = arith.addf %88, %89 : vector<10x16x16xf32>
    %92 = arith.addf %90, %91 : vector<10x16x16xf32>
    %93 = arith.addf %92, %85 : vector<10x16x16xf32>
    %c0_45 = arith.constant 0 : index
    %c0_46 = arith.constant 0 : index
    %94 = vector.load %arg4[%c0_45, %c0_46] : memref<1x16xf32, #tpu.memory_space<vmem>>, vector<1x16xf32>
    %95 = vector.shape_cast %94 : vector<1x16xf32> to vector<16xf32>
    %96 = vector.shape_cast %95 : vector<16xf32> to vector<1x1x16xf32>
    %97 = vector.broadcast %96 : vector<1x1x16xf32> to vector<10x16x16xf32>
    %98 = arith.addf %93, %97 : vector<10x16x16xf32>
    %99 = vector.shape_cast %98 : vector<10x16x16xf32> to vector<160x16xf32>
    %c0_47 = arith.constant 0 : index
    %c0_48 = arith.constant 0 : index
    %100 = vector.load %arg5[%c0_47, %c0_48] : memref<16x64xf32, #tpu.memory_space<vmem>>, vector<16x64xf32>
    %cst = arith.constant dense<0.000000e+00> : vector<160x64xf32>
    %101 = tpu.matmul %99, %100, %cst {dimension_numbers = #tpu.dot_dimension_numbers<[1], [0], [0], [1], [0, 0, 1, 1], [], []>} : vector<160x16xf32>, vector<16x64xf32>, vector<160x64xf32> -> vector<160x64xf32>
    %c0_49 = arith.constant 0 : index
    %c0_50 = arith.constant 0 : index
    %102 = vector.load %arg6[%c0_49, %c0_50] : memref<1x64xf32, #tpu.memory_space<vmem>>, vector<1x64xf32>
    %103 = vector.shape_cast %102 : vector<1x64xf32> to vector<64xf32>
    %104 = vector.shape_cast %103 : vector<64xf32> to vector<1x64xf32>
    %105 = vector.broadcast %104 : vector<1x64xf32> to vector<160x64xf32>
    %106 = arith.addf %101, %105 : vector<160x64xf32>
    %cst_51 = arith.constant 0.000000e+00 : f32
    %107 = vector.broadcast %cst_51 : f32 to vector<160x64xf32>
    %108 = arith.maximumf %106, %107 : vector<160x64xf32>
    %109 = vector.shape_cast %108 : vector<160x64xf32> to vector<10x16x64xf32>
    %110 = tpu.iota {dimensions = array<i32: 0>} : vector<10x1x1xi32>
    %111 = vector.broadcast %4 : i32 to vector<10x1x1xi32>
    %112 = arith.addi %110, %111 : vector<10x1x1xi32>
    %c0_i32_52 = arith.constant 0 : i32
    %113 = vector.broadcast %c0_i32_52 : i32 to vector<10x1x1xi32>
    %114 = arith.cmpi sge, %112, %113 : vector<10x1x1xi32>
    %c16_i32 = arith.constant 16 : i32
    %115 = vector.broadcast %c16_i32 : i32 to vector<10x1x1xi32>
    %116 = arith.cmpi slt, %112, %115 : vector<10x1x1xi32>
    %117 = arith.andi %114, %116 : vector<10x1x1xi1>
    %cst_53 = arith.constant 0.000000e+00 : f32
    %118 = vector.shape_cast %117 : vector<10x1x1xi1> to vector<10x1x1xi1>
    %119 = vector.broadcast %118 : vector<10x1x1xi1> to vector<10x16x64xi1>
    %120 = vector.broadcast %cst_53 : f32 to vector<10x16x64xf32>
    %121 = arith.select %119, %109, %120 : vector<10x16x64xi1>, vector<10x16x64xf32>
    %cst_54 = arith.constant 0.000000e+00 : f32
    %122 = vector.broadcast %cst_54 : f32 to vector<10x8x64xf32>
    %c0_55 = arith.constant 0 : index
    %c0_56 = arith.constant 0 : index
    %c0_57 = arith.constant 0 : index
    %123 = vector.load %arg12[%c0_55, %c0_56, %c0_57] : memref<10x25x64xf32, #tpu.memory_space<vmem>>, vector<10x8x64xf32>
    tpu.vector_store %arg12[%c0_55, %c0_56, %c0_57], %122 {strides = array<i32>} : memref<10x25x64xf32, #tpu.memory_space<vmem>>, vector<10x8x64xf32>,
    %cst_58 = arith.constant 0.000000e+00 : f32
    %124 = vector.broadcast %cst_58 : f32 to vector<10x1x64xf32>
    %c0_59 = arith.constant 0 : index
    %c24 = arith.constant 24 : index
    %c0_60 = arith.constant 0 : index
    %125 = vector.load %arg12[%c0_59, %c24, %c0_60] : memref<10x25x64xf32, #tpu.memory_space<vmem>>, vector<10x1x64xf32>
    tpu.vector_store %arg12[%c0_59, %c24, %c0_60], %124 {strides = array<i32>} : memref<10x25x64xf32, #tpu.memory_space<vmem>>, vector<10x1x64xf32>,
    %c0_61 = arith.constant 0 : index
    %c8_62 = arith.constant 8 : index
    %c0_63 = arith.constant 0 : index
    %126 = vector.load %arg12[%c0_61, %c8_62, %c0_63] : memref<10x25x64xf32, #tpu.memory_space<vmem>>, vector<10x16x64xf32>
    tpu.vector_store %arg12[%c0_61, %c8_62, %c0_63], %121 {strides = array<i32>} : memref<10x25x64xf32, #tpu.memory_space<vmem>>, vector<10x16x64xf32>,
    %c0_64 = arith.constant 0 : index
    %c7_65 = arith.constant 7 : index
    %c0_66 = arith.constant 0 : index
    %127 = vector.load %arg12[%c0_64, %c7_65, %c0_66] : memref<10x25x64xf32, #tpu.memory_space<vmem>>, vector<8x16x64xf32>
    %c0_67 = arith.constant 0 : index
    %c0_68 = arith.constant 0 : index
    %128 = vector.load %arg7[%c0_67, %c0_68] : memref<9x64xf32, #tpu.memory_space<vmem>>, vector<1x64xf32>
    %129 = vector.shape_cast %128 : vector<1x64xf32> to vector<64xf32>
    %130 = vector.shape_cast %129 : vector<64xf32> to vector<1x1x64xf32>
    %131 = vector.broadcast %130 : vector<1x1x64xf32> to vector<8x16x64xf32>
    %132 = arith.mulf %127, %131 : vector<8x16x64xf32>
    %c0_69 = arith.constant 0 : index
    %c8_70 = arith.constant 8 : index
    %c0_71 = arith.constant 0 : index
    %133 = vector.load %arg12[%c0_69, %c8_70, %c0_71] : memref<10x25x64xf32, #tpu.memory_space<vmem>>, vector<8x16x64xf32>
    %c1_72 = arith.constant 1 : index
    %c0_73 = arith.constant 0 : index
    %134 = vector.load %arg7[%c1_72, %c0_73] : memref<9x64xf32, #tpu.memory_space<vmem>>, vector<1x64xf32>
    %135 = vector.shape_cast %134 : vector<1x64xf32> to vector<64xf32>
    %136 = vector.shape_cast %135 : vector<64xf32> to vector<1x1x64xf32>
    %137 = vector.broadcast %136 : vector<1x1x64xf32> to vector<8x16x64xf32>
    %138 = arith.mulf %133, %137 : vector<8x16x64xf32>
    %c0_74 = arith.constant 0 : index
    %c9 = arith.constant 9 : index
    %c0_75 = arith.constant 0 : index
    %139 = vector.load %arg12[%c0_74, %c9, %c0_75] : memref<10x25x64xf32, #tpu.memory_space<vmem>>, vector<8x16x64xf32>
    %c2_76 = arith.constant 2 : index
    %c0_77 = arith.constant 0 : index
    %140 = vector.load %arg7[%c2_76, %c0_77] : memref<9x64xf32, #tpu.memory_space<vmem>>, vector<1x64xf32>
    %141 = vector.shape_cast %140 : vector<1x64xf32> to vector<64xf32>
    %142 = vector.shape_cast %141 : vector<64xf32> to vector<1x1x64xf32>
    %143 = vector.broadcast %142 : vector<1x1x64xf32> to vector<8x16x64xf32>
    %144 = arith.mulf %139, %143 : vector<8x16x64xf32>
    %c1_78 = arith.constant 1 : index
    %c7_79 = arith.constant 7 : index
    %c0_80 = arith.constant 0 : index
    %145 = vector.load %arg12[%c1_78, %c7_79, %c0_80] : memref<10x25x64xf32, #tpu.memory_space<vmem>>, vector<8x16x64xf32>
    %c3_81 = arith.constant 3 : index
    %c0_82 = arith.constant 0 : index
    %146 = vector.load %arg7[%c3_81, %c0_82] : memref<9x64xf32, #tpu.memory_space<vmem>>, vector<1x64xf32>
    %147 = vector.shape_cast %146 : vector<1x64xf32> to vector<64xf32>
    %148 = vector.shape_cast %147 : vector<64xf32> to vector<1x1x64xf32>
    %149 = vector.broadcast %148 : vector<1x1x64xf32> to vector<8x16x64xf32>
    %150 = arith.mulf %145, %149 : vector<8x16x64xf32>
    %c1_83 = arith.constant 1 : index
    %c8_84 = arith.constant 8 : index
    %c0_85 = arith.constant 0 : index
    %151 = vector.load %arg12[%c1_83, %c8_84, %c0_85] : memref<10x25x64xf32, #tpu.memory_space<vmem>>, vector<8x16x64xf32>
    %c4_86 = arith.constant 4 : index
    %c0_87 = arith.constant 0 : index
    %152 = vector.load %arg7[%c4_86, %c0_87] : memref<9x64xf32, #tpu.memory_space<vmem>>, vector<1x64xf32>
    %153 = vector.shape_cast %152 : vector<1x64xf32> to vector<64xf32>
    %154 = vector.shape_cast %153 : vector<64xf32> to vector<1x1x64xf32>
    %155 = vector.broadcast %154 : vector<1x1x64xf32> to vector<8x16x64xf32>
    %156 = arith.mulf %151, %155 : vector<8x16x64xf32>
    %c1_88 = arith.constant 1 : index
    %c9_89 = arith.constant 9 : index
    %c0_90 = arith.constant 0 : index
    %157 = vector.load %arg12[%c1_88, %c9_89, %c0_90] : memref<10x25x64xf32, #tpu.memory_space<vmem>>, vector<8x16x64xf32>
    %c5_91 = arith.constant 5 : index
    %c0_92 = arith.constant 0 : index
    %158 = vector.load %arg7[%c5_91, %c0_92] : memref<9x64xf32, #tpu.memory_space<vmem>>, vector<1x64xf32>
    %159 = vector.shape_cast %158 : vector<1x64xf32> to vector<64xf32>
    %160 = vector.shape_cast %159 : vector<64xf32> to vector<1x1x64xf32>
    %161 = vector.broadcast %160 : vector<1x1x64xf32> to vector<8x16x64xf32>
    %162 = arith.mulf %157, %161 : vector<8x16x64xf32>
    %c2_93 = arith.constant 2 : index
    %c7_94 = arith.constant 7 : index
    %c0_95 = arith.constant 0 : index
    %163 = vector.load %arg12[%c2_93, %c7_94, %c0_95] : memref<10x25x64xf32, #tpu.memory_space<vmem>>, vector<8x16x64xf32>
    %c6_96 = arith.constant 6 : index
    %c0_97 = arith.constant 0 : index
    %164 = vector.load %arg7[%c6_96, %c0_97] : memref<9x64xf32, #tpu.memory_space<vmem>>, vector<1x64xf32>
    %165 = vector.shape_cast %164 : vector<1x64xf32> to vector<64xf32>
    %166 = vector.shape_cast %165 : vector<64xf32> to vector<1x1x64xf32>
    %167 = vector.broadcast %166 : vector<1x1x64xf32> to vector<8x16x64xf32>
    %168 = arith.mulf %163, %167 : vector<8x16x64xf32>
    %c2_98 = arith.constant 2 : index
    %c8_99 = arith.constant 8 : index
    %c0_100 = arith.constant 0 : index
    %169 = vector.load %arg12[%c2_98, %c8_99, %c0_100] : memref<10x25x64xf32, #tpu.memory_space<vmem>>, vector<8x16x64xf32>
    %c7_101 = arith.constant 7 : index
    %c0_102 = arith.constant 0 : index
    %170 = vector.load %arg7[%c7_101, %c0_102] : memref<9x64xf32, #tpu.memory_space<vmem>>, vector<1x64xf32>
    %171 = vector.shape_cast %170 : vector<1x64xf32> to vector<64xf32>
    %172 = vector.shape_cast %171 : vector<64xf32> to vector<1x1x64xf32>
    %173 = vector.broadcast %172 : vector<1x1x64xf32> to vector<8x16x64xf32>
    %174 = arith.mulf %169, %173 : vector<8x16x64xf32>
    %c2_103 = arith.constant 2 : index
    %c9_104 = arith.constant 9 : index
    %c0_105 = arith.constant 0 : index
    %175 = vector.load %arg12[%c2_103, %c9_104, %c0_105] : memref<10x25x64xf32, #tpu.memory_space<vmem>>, vector<8x16x64xf32>
    %c8_106 = arith.constant 8 : index
    %c0_107 = arith.constant 0 : index
    %176 = vector.load %arg7[%c8_106, %c0_107] : memref<9x64xf32, #tpu.memory_space<vmem>>, vector<1x64xf32>
    %177 = vector.shape_cast %176 : vector<1x64xf32> to vector<64xf32>
    %178 = vector.shape_cast %177 : vector<64xf32> to vector<1x1x64xf32>
    %179 = vector.broadcast %178 : vector<1x1x64xf32> to vector<8x16x64xf32>
    %180 = arith.mulf %175, %179 : vector<8x16x64xf32>
    %181 = arith.addf %132, %138 : vector<8x16x64xf32>
    %182 = arith.addf %144, %150 : vector<8x16x64xf32>
    %183 = arith.addf %156, %162 : vector<8x16x64xf32>
    %184 = arith.addf %168, %174 : vector<8x16x64xf32>
    %185 = arith.addf %181, %182 : vector<8x16x64xf32>
    %186 = arith.addf %183, %184 : vector<8x16x64xf32>
    %187 = arith.addf %185, %186 : vector<8x16x64xf32>
    %188 = arith.addf %187, %180 : vector<8x16x64xf32>
    %c0_108 = arith.constant 0 : index
    %c0_109 = arith.constant 0 : index
    %189 = vector.load %arg8[%c0_108, %c0_109] : memref<1x64xf32, #tpu.memory_space<vmem>>, vector<1x64xf32>
    %190 = vector.shape_cast %189 : vector<1x64xf32> to vector<64xf32>
    %191 = vector.shape_cast %190 : vector<64xf32> to vector<1x1x64xf32>
    %192 = vector.broadcast %191 : vector<1x1x64xf32> to vector<8x16x64xf32>
    %193 = arith.addf %188, %192 : vector<8x16x64xf32>
    %cst_110 = arith.constant 0.000000e+00 : f32
    %194 = vector.broadcast %cst_110 : f32 to vector<8x16x64xf32>
    %195 = arith.maximumf %193, %194 : vector<8x16x64xf32>
    %196 = vector.shape_cast %195 : vector<8x16x64xf32> to vector<128x64xf32>
    %c0_111 = arith.constant 0 : index
    %c0_112 = arith.constant 0 : index
    %197 = vector.load %arg9[%c0_111, %c0_112] : memref<64x16xf32, #tpu.memory_space<vmem>>, vector<64x16xf32>
    %cst_113 = arith.constant dense<0.000000e+00> : vector<128x16xf32>
    %198 = tpu.matmul %196, %197, %cst_113 {dimension_numbers = #tpu.dot_dimension_numbers<[1], [0], [0], [1], [0, 0, 1, 1], [], []>} : vector<128x64xf32>, vector<64x16xf32>, vector<128x16xf32> -> vector<128x16xf32>
    %c0_114 = arith.constant 0 : index
    %c0_115 = arith.constant 0 : index
    %199 = vector.load %arg10[%c0_114, %c0_115] : memref<1x16xf32, #tpu.memory_space<vmem>>, vector<1x16xf32>
    %200 = vector.shape_cast %199 : vector<1x16xf32> to vector<16xf32>
    %201 = vector.shape_cast %200 : vector<16xf32> to vector<1x16xf32>
    %202 = vector.broadcast %201 : vector<1x16xf32> to vector<128x16xf32>
    %203 = arith.addf %198, %202 : vector<128x16xf32>
    %204 = vector.shape_cast %203 : vector<128x16xf32> to vector<8x16x16xf32>
    %c2_i32_116 = arith.constant 2 : i32
    %205 = arith.addi %1, %c2_i32_116 : i32
    %c0_117 = arith.constant 0 : index
    %206 = arith.index_cast %205 : i32 to index
    %c1_118 = arith.constant 1 : index
    %c0_119 = arith.constant 0 : index
    %207 = vector.load %arg2[%c0_117, %206, %c1_118, %c0_119] : memref<1x20x18x16xf32, #tpu.memory_space<vmem>>, vector<1x8x16x16xf32>
    %208 = vector.shape_cast %207 : vector<1x8x16x16xf32> to vector<8x16x16xf32>
    %209 = arith.addf %204, %208 : vector<8x16x16xf32>
    %c0_120 = arith.constant 0 : index
    %c0_121 = arith.constant 0 : index
    %c0_122 = arith.constant 0 : index
    %c0_123 = arith.constant 0 : index
    %210 = vector.load %arg11[%c0_120, %c0_121, %c0_122, %c0_123] : memref<1x8x16x16xf32, #tpu.memory_space<vmem>>, vector<1x8x16x16xf32>
    %211 = vector.shape_cast %210 : vector<1x8x16x16xf32> to vector<8x16x16xf32>
    %212 = vector.shape_cast %209 : vector<8x16x16xf32> to vector<1x8x16x16xf32>
    tpu.vector_store %arg11[%c0_120, %c0_121, %c0_122, %c0_123], %212 {strides = array<i32>} : memref<1x8x16x16xf32, #tpu.memory_space<vmem>>, vector<1x8x16x16xf32>,
    return
  }
  func.func @transform_0(%arg0: i32, %arg1: i32) -> (i32, i32, i32, i32) {
    %c0_i32 = arith.constant 0 : i32
    %c0_i32_0 = arith.constant 0 : i32
    %c0_i32_1 = arith.constant 0 : i32
    %c0_i32_2 = arith.constant 0 : i32
    return %arg0, %c0_i32, %c0_i32_0, %c0_i32_1 : i32, i32, i32, i32
  }
  func.func @transform_1(%arg0: i32, %arg1: i32) -> (i32, i32) {
    %c0_i32 = arith.constant 0 : i32
    %c0_i32_0 = arith.constant 0 : i32
    %c0_i32_1 = arith.constant 0 : i32
    return %c0_i32, %c0_i32_0 : i32, i32
  }
  func.func @transform_2(%arg0: i32, %arg1: i32) -> (i32, i32) {
    %c0_i32 = arith.constant 0 : i32
    %c0_i32_0 = arith.constant 0 : i32
    %c0_i32_1 = arith.constant 0 : i32
    return %c0_i32, %c0_i32_0 : i32, i32
  }
  func.func @transform_3(%arg0: i32, %arg1: i32) -> (i32, i32) {
    %c0_i32 = arith.constant 0 : i32
    %c0_i32_0 = arith.constant 0 : i32
    %c0_i32_1 = arith.constant 0 : i32
    return %c0_i32, %c0_i32_0 : i32, i32
  }
  func.func @transform_4(%arg0: i32, %arg1: i32) -> (i32, i32) {
    %c0_i32 = arith.constant 0 : i32
    %c0_i32_0 = arith.constant 0 : i32
    %c0_i32_1 = arith.constant 0 : i32
    return %c0_i32, %c0_i32_0 : i32, i32
  }
  func.func @transform_5(%arg0: i32, %arg1: i32) -> (i32, i32) {
    %c0_i32 = arith.constant 0 : i32
    %c0_i32_0 = arith.constant 0 : i32
    %c0_i32_1 = arith.constant 0 : i32
    return %c0_i32, %c0_i32_0 : i32, i32
  }
  func.func @transform_6(%arg0: i32, %arg1: i32) -> (i32, i32) {
    %c0_i32 = arith.constant 0 : i32
    %c0_i32_0 = arith.constant 0 : i32
    %c0_i32_1 = arith.constant 0 : i32
    return %c0_i32, %c0_i32_0 : i32, i32
  }
  func.func @transform_7(%arg0: i32, %arg1: i32) -> (i32, i32) {
    %c0_i32 = arith.constant 0 : i32
    %c0_i32_0 = arith.constant 0 : i32
    %c0_i32_1 = arith.constant 0 : i32
    return %c0_i32, %c0_i32_0 : i32, i32
  }
  func.func @transform_8(%arg0: i32, %arg1: i32) -> (i32, i32) {
    %c0_i32 = arith.constant 0 : i32
    %c0_i32_0 = arith.constant 0 : i32
    %c0_i32_1 = arith.constant 0 : i32
    return %c0_i32, %c0_i32_0 : i32, i32
  }
  func.func @transform_9(%arg0: i32, %arg1: i32) -> (i32, i32, i32, i32) {
    %c0_i32 = arith.constant 0 : i32
    %c0_i32_0 = arith.constant 0 : i32
    %c0_i32_1 = arith.constant 0 : i32
    return %arg0, %arg1, %c0_i32, %c0_i32_0 : i32, i32, i32, i32
  }
}

</mosaic_0001>

<llo_original>
// kernel: tpu_custom_call.1
$region0: #{tpu_custom_call.1}
  #allocation0 [shape = 'u32[]', space=smem, size = 0x4, offset = 0x4, fixed_abs, tag = 'smem constant byte address 0x4 - core index']
  #allocation1 [shape = 'u32[72,128]{1,0:T(1,128)}', space=vmem, size = 0x9000, scoped, tag = 'internal scratch']
  #allocation2 [shape = 'f32[10,25,64]{2,1,0:T(8,128)}', space=vmem, size = 0x28000, scoped, tag = 'scratch operand']
  %s0 = inlined_call_operand.vmem [shape: f32[2,20,18,16], index: 0, kind: input, shape index: {}]
  %s1 = inlined_call_operand.vmem [shape: f32[9,16], index: 1, kind: input, shape index: {}]
  %s2 = inlined_call_operand.vmem [shape: f32[1,16], index: 2, kind: input, shape index: {}]
  %s3 = inlined_call_operand.vmem [shape: f32[16,64], index: 3, kind: input, shape index: {}]
  %s4 = inlined_call_operand.vmem [shape: f32[1,64], index: 4, kind: input, shape index: {}]
  %s5 = inlined_call_operand.vmem [shape: f32[9,64], index: 5, kind: input, shape index: {}]
  %s6 = inlined_call_operand.vmem [shape: f32[1,64], index: 6, kind: input, shape index: {}]
  %s7 = inlined_call_operand.vmem [shape: f32[64,16], index: 7, kind: input, shape index: {}]
  %s8 = inlined_call_operand.vmem [shape: f32[1,16], index: 8, kind: input, shape index: {}]
  %s9 = inlined_call_operand.hbm [shape: f32[2,16,16,16], index: 9, kind: output, shape index: {}]
  %s10 = sld [smem:[#allocation0]]
  $region69: #{tpu_custom_call.1} parent=0
    _
  %s12 = ssub.s32 1, %s10
  %s13 = scalar_select 0, %s12, %s10
  $region1: #{tpu_custom_call.1} parent=0
    #allocation3 [shape = 'u8[131072]{0}', space=vmem, size = 0x20000, scoped, tag = 'output window, operand 0']
    #allocation4 [shape = 's32[2]{0}', space=sflag, size = 0x8, scoped, tag = 'scoped memory for tpu_custom_call.1']
    %14 = vsyncpa [#allocation4], 0
    %s15 = scalar_lea.sflag [#allocation4], 1
    %16 = vsyncpa %s15, 0
    loop: start=0, step=1, limit=6
    $region2: #{tpu_custom_call.1} parent=1 // loop_pre_header
      _
    $region3: #{tpu_custom_call.1} parent=1 // loop_header
      %s18 = sphi 0, %s22
      %p19 = scmp.ge.s32.totalorder %s18, 6
      %s25 = sphi 0, %s37
      %s26 = sphi 0, %s33
      %s27 = sphi 0, %s25
      %s28 = sphi 0, %s26
      %s29 = sphi 0, %s27
      %s30 = sphi 0, %s28
      %s40 = sphi 0, %s42
      %s43 = sphi 0, %s40
      %s44 = sphi 0, %s43
      %s60 = sphi 0, %s44
      %s64 = sphi 0, %s64
      %s66 = sphi 0, %s64
      %s67 = sphi 0, %s66
      %s81 = sphi 0, %s67
      %s85 = sphi 0, %s85
      %s87 = sphi 0, %s85
      %s88 = sphi 0, %s87
      %s102 = sphi 0, %s88
      %s106 = sphi 0, %s106
      %s108 = sphi 0, %s106
      %s109 = sphi 0, %s108
      %s123 = sphi 0, %s109
      %s127 = sphi 0, %s127
      %s129 = sphi 0, %s127
      %s130 = sphi 0, %s129
      %s144 = sphi 0, %s130
      %s148 = sphi 0, %s148
      %s150 = sphi 0, %s148
      %s151 = sphi 0, %s150
      %s165 = sphi 0, %s151
      %s169 = sphi 0, %s169
      %s171 = sphi 0, %s169
      %s172 = sphi 0, %s171
      %s186 = sphi 0, %s172
      %s190 = sphi 0, %s190
      %s192 = sphi 0, %s190
      %s193 = sphi 0, %s192
      %s207 = sphi 0, %s193
      %s211 = sphi 0, %s211
      %s213 = sphi 0, %s211
      %s214 = sphi 0, %s213
      %s228 = sphi 0, %s214
      %s236 = sphi 0, %s238
      %s239 = sphi 0, %s236
      %s240 = sphi 0, %s239
      %s256 = sphi 0, %s240
    $region4: #{tpu_custom_call.1} parent=1 // loop_header_branch
      %21 = sbr.rel (%p19) target = $region8
    $region5: #{tpu_custom_call.1} parent=1 // loop_body
      %s23 = ssub.s32 %s18, 1
      %s24 = ssub.s32 %s18, 2
      %s31 = sadd.s32 1, %s26
      %p32 = scmp.ge.s32.totalorder %s31, 2
      %s33 = scalar_select %p32, 0, %s31
      %s34 = sadd.s32 1, %s25
      %s35 = scalar_select %p32, %s34, %s25
      %p36 = scmp.ge.s32.totalorder %s35, 2
      %s37 = scalar_select %p36, 0, %s35
      %s38 = ssub.s32 %s25, %s37
      %p39 = scmp.eq.s32.totalorder %s38, 0
      %s41 = sadd.s32 %s40, 1
      %s42 = scalar_select %p39, %s40, %s41
      %p45 = pneg %p39
      %p46 = scmp.eq.s32.totalorder %s18, 3
      %p47 = por %p45, %p46
      %p48 = scmp.ne.s32.totalorder %s40, %s43
      %p49 = scmp.eq.s32.totalorder %s18, 0
      %p50 = por %p48, %p49
      %p51 = scmp.ne.s32.totalorder %s40, %s43
      %p52 = scmp.eq.s32.totalorder %s23, 3
      %p53 = por %p51, %p52
      %p54 = scmp.ne.s32.totalorder %s43, %s44
      %p55 = scmp.eq.s32.totalorder %s23, 0
      %p56 = por %p54, %p55
      %p57 = scmp.ne.s32.totalorder %s43, %s44
      %p58 = scmp.eq.s32.totalorder %s24, 3
      %p59 = por %p57, %p58
      %p61 = scmp.ne.s32.totalorder %s44, %s60
      %p62 = scmp.eq.s32.totalorder %s24, 0
      %p63 = por %p61, %p62
      %s65 = sadd.s32 %s64, 1
      %p68 = scmp.eq.s32.totalorder %s18, 3
      %p69 = scmp.ne.s32.totalorder %s64, %s66
      %p70 = scmp.eq.s32.totalorder %s18, 0
      %p71 = por %p69, %p70
      %p72 = scmp.ne.s32.totalorder %s64, %s66
      %p73 = scmp.eq.s32.totalorder %s23, 3
      %p74 = por %p72, %p73
      %p75 = scmp.ne.s32.totalorder %s66, %s67
      %p76 = scmp.eq.s32.totalorder %s23, 0
      %p77 = por %p75, %p76
      %p78 = scmp.ne.s32.totalorder %s66, %s67
      %p79 = scmp.eq.s32.totalorder %s24, 3
      %p80 = por %p78, %p79
      %p82 = scmp.ne.s32.totalorder %s67, %s81
      %p83 = scmp.eq.s32.totalorder %s24, 0
      %p84 = por %p82, %p83
      %s86 = sadd.s32 %s85, 1
      %p89 = scmp.eq.s32.totalorder %s18, 3
      %p90 = scmp.ne.s32.totalorder %s85, %s87
      %p91 = scmp.eq.s32.totalorder %s18, 0
      %p92 = por %p90, %p91
      %p93 = scmp.ne.s32.totalorder %s85, %s87
      %p94 = scmp.eq.s32.totalorder %s23, 3
      %p95 = por %p93, %p94
      %p96 = scmp.ne.s32.totalorder %s87, %s88
      %p97 = scmp.eq.s32.totalorder %s23, 0
      %p98 = por %p96, %p97
      %p99 = scmp.ne.s32.totalorder %s87, %s88
      %p100 = scmp.eq.s32.totalorder %s24, 3
      %p101 = por %p99, %p100
      %p103 = scmp.ne.s32.totalorder %s88, %s102
      %p104 = scmp.eq.s32.totalorder %s24, 0
      %p105 = por %p103, %p104
      %s107 = sadd.s32 %s106, 1
      %p110 = scmp.eq.s32.totalorder %s18, 3
      %p111 = scmp.ne.s32.totalorder %s106, %s108
      %p112 = scmp.eq.s32.totalorder %s18, 0
      %p113 = por %p111, %p112
      %p114 = scmp.ne.s32.totalorder %s106, %s108
      %p115 = scmp.eq.s32.totalorder %s23, 3
      %p116 = por %p114, %p115
      %p117 = scmp.ne.s32.totalorder %s108, %s109
      %p118 = scmp.eq.s32.totalorder %s23, 0
      %p119 = por %p117, %p118
      %p120 = scmp.ne.s32.totalorder %s108, %s109
      %p121 = scmp.eq.s32.totalorder %s24, 3
      %p122 = por %p120, %p121
      %p124 = scmp.ne.s32.totalorder %s109, %s123
      %p125 = scmp.eq.s32.totalorder %s24, 0
      %p126 = por %p124, %p125
      %s128 = sadd.s32 %s127, 1
      %p131 = scmp.eq.s32.totalorder %s18, 3
      %p132 = scmp.ne.s32.totalorder %s127, %s129
      %p133 = scmp.eq.s32.totalorder %s18, 0
      %p134 = por %p132, %p133
      %p135 = scmp.ne.s32.totalorder %s127, %s129
      %p136 = scmp.eq.s32.totalorder %s23, 3
      %p137 = por %p135, %p136
      %p138 = scmp.ne.s32.totalorder %s129, %s130
      %p139 = scmp.eq.s32.totalorder %s23, 0
      %p140 = por %p138, %p139
      %p141 = scmp.ne.s32.totalorder %s129, %s130
      %p142 = scmp.eq.s32.totalorder %s24, 3
      %p143 = por %p141, %p142
      %p145 = scmp.ne.s32.totalorder %s130, %s144
      %p146 = scmp.eq.s32.totalorder %s24, 0
      %p147 = por %p145, %p146
      %s149 = sadd.s32 %s148, 1
      %p152 = scmp.eq.s32.totalorder %s18, 3
      %p153 = scmp.ne.s32.totalorder %s148, %s150
      %p154 = scmp.eq.s32.totalorder %s18, 0
      %p155 = por %p153, %p154
      %p156 = scmp.ne.s32.totalorder %s148, %s150
      %p157 = scmp.eq.s32.totalorder %s23, 3
      %p158 = por %p156, %p157
      %p159 = scmp.ne.s32.totalorder %s150, %s151
      %p160 = scmp.eq.s32.totalorder %s23, 0
      %p161 = por %p159, %p160
      %p162 = scmp.ne.s32.totalorder %s150, %s151
      %p163 = scmp.eq.s32.totalorder %s24, 3
      %p164 = por %p162, %p163
      %p166 = scmp.ne.s32.totalorder %s151, %s165
      %p167 = scmp.eq.s32.totalorder %s24, 0
      %p168 = por %p166, %p167
      %s170 = sadd.s32 %s169, 1
      %p173 = scmp.eq.s32.totalorder %s18, 3
      %p174 = scmp.ne.s32.totalorder %s169, %s171
      %p175 = scmp.eq.s32.totalorder %s18, 0
      %p176 = por %p174, %p175
      %p177 = scmp.ne.s32.totalorder %s169, %s171
      %p178 = scmp.eq.s32.totalorder %s23, 3
      %p179 = por %p177, %p178
      %p180 = scmp.ne.s32.totalorder %s171, %s172
      %p181 = scmp.eq.s32.totalorder %s23, 0
      %p182 = por %p180, %p181
      %p183 = scmp.ne.s32.totalorder %s171, %s172
      %p184 = scmp.eq.s32.totalorder %s24, 3
      %p185 = por %p183, %p184
      %p187 = scmp.ne.s32.totalorder %s172, %s186
      %p188 = scmp.eq.s32.totalorder %s24, 0
      %p189 = por %p187, %p188
      %s191 = sadd.s32 %s190, 1
      %p194 = scmp.eq.s32.totalorder %s18, 3
      %p195 = scmp.ne.s32.totalorder %s190, %s192
      %p196 = scmp.eq.s32.totalorder %s18, 0
      %p197 = por %p195, %p196
      %p198 = scmp.ne.s32.totalorder %s190, %s192
      %p199 = scmp.eq.s32.totalorder %s23, 3
      %p200 = por %p198, %p199
      %p201 = scmp.ne.s32.totalorder %s192, %s193
      %p202 = scmp.eq.s32.totalorder %s23, 0
      %p203 = por %p201, %p202
      %p204 = scmp.ne.s32.totalorder %s192, %s193
      %p205 = scmp.eq.s32.totalorder %s24, 3
      %p206 = por %p204, %p205
      %p208 = scmp.ne.s32.totalorder %s193, %s207
      %p209 = scmp.eq.s32.totalorder %s24, 0
      %p210 = por %p208, %p209
      %s212 = sadd.s32 %s211, 1
      %p215 = scmp.eq.s32.totalorder %s18, 3
      %p216 = scmp.ne.s32.totalorder %s211, %s213
      %p217 = scmp.eq.s32.totalorder %s18, 0
      %p218 = por %p216, %p217
      %p219 = scmp.ne.s32.totalorder %s211, %s213
      %p220 = scmp.eq.s32.totalorder %s23, 3
      %p221 = por %p219, %p220
      %p222 = scmp.ne.s32.totalorder %s213, %s214
      %p223 = scmp.eq.s32.totalorder %s23, 0
      %p224 = por %p222, %p223
      %p225 = scmp.ne.s32.totalorder %s213, %s214
      %p226 = scmp.eq.s32.totalorder %s24, 3
      %p227 = por %p225, %p226
      %p229 = scmp.ne.s32.totalorder %s214, %s228
      %p230 = scmp.eq.s32.totalorder %s24, 0
      %p231 = por %p229, %p230
      %s232 = ssub.s32 %s25, %s37
      %s233 = ssub.s32 %s26, %s33
      %s234 = sor.u32 %s232, %s233
      %p235 = scmp.eq.s32.totalorder %s234, 0
      %s237 = sadd.s32 %s236, 1
      %s238 = scalar_select %p235, %s236, %s237
      %p241 = pneg %p235
      %p242 = scmp.eq.s32.totalorder %s18, 3
      %p243 = por %p241, %p242
      %p244 = scmp.ne.s32.totalorder %s236, %s239
      %p245 = scmp.eq.s32.totalorder %s18, 0
      %p246 = por %p244, %p245
      %p247 = scmp.ne.s32.totalorder %s236, %s239
      %p248 = scmp.eq.s32.totalorder %s23, 3
      %p249 = por %p247, %p248
      %p250 = scmp.ne.s32.totalorder %s239, %s240
      %p251 = scmp.eq.s32.totalorder %s23, 0
      %p252 = por %p250, %p251
      %p253 = scmp.ne.s32.totalorder %s239, %s240
      %p254 = scmp.eq.s32.totalorder %s24, 3
      %p255 = por %p253, %p254
      %p257 = scmp.ne.s32.totalorder %s240, %s256
      %p258 = scmp.eq.s32.totalorder %s24, 0
      %p259 = por %p257, %p258
      %p260 = scmp.le.s32.totalorder 1, %s18
      %p261 = scmp.lt.s32.totalorder %s18, 5
      %p262 = pnand %p260, %p261
      %p263 = pneg %p262
      // Predicated region
      $region9: #{tpu_custom_call.1} parent=5 // pred_check
        _
      $region10: #{tpu_custom_call.1} parent=5 // pred_check_branch
        %265 = sbr.rel (%p262) target = $region12
      $region11: #{tpu_custom_call.1} parent=5 // pred_region
        %s266 = ssub.s32 %s18, 1
        // Predicated region
        $region13: #{tpu_custom_call.1} parent=11 // pred_check
          %p267 = pneg %p77
        $region14: #{tpu_custom_call.1} parent=11 // pred_check_branch
          %269 = sbr.rel (%p267) target = $region16
        $region15: #{tpu_custom_call.1} parent=11 // pred_region
          _
        $region16: #{tpu_custom_call.1} parent=11 // pred_fallthru
          _
        // Predicated region
        $region17: #{tpu_custom_call.1} parent=11 // pred_check
          %p270 = pneg %p98
        $region18: #{tpu_custom_call.1} parent=11 // pred_check_branch
          %272 = sbr.rel (%p270) target = $region20
        $region19: #{tpu_custom_call.1} parent=11 // pred_region
          _
        $region20: #{tpu_custom_call.1} parent=11 // pred_fallthru
          _
        // Predicated region
        $region21: #{tpu_custom_call.1} parent=11 // pred_check
          %p273 = pneg %p119
        $region22: #{tpu_custom_call.1} parent=11 // pred_check_branch
          %275 = sbr.rel (%p273) target = $region24
        $region23: #{tpu_custom_call.1} parent=11 // pred_region
          _
        $region24: #{tpu_custom_call.1} parent=11 // pred_fallthru
          _
        // Predicated region
        $region25: #{tpu_custom_call.1} parent=11 // pred_check
          %p276 = pneg %p140
        $region26: #{tpu_custom_call.1} parent=11 // pred_check_branch
          %278 = sbr.rel (%p276) target = $region28
        $region27: #{tpu_custom_call.1} parent=11 // pred_region
          _
        $region28: #{tpu_custom_call.1} parent=11 // pred_fallthru
          _
        // Predicated region
        $region29: #{tpu_custom_call.1} parent=11 // pred_check
          %p279 = pneg %p161
        $region30: #{tpu_custom_call.1} parent=11 // pred_check_branch
          %281 = sbr.rel (%p279) target = $region32
        $region31: #{tpu_custom_call.1} parent=11 // pred_region
          _
        $region32: #{tpu_custom_call.1} parent=11 // pred_fallthru
          _
        // Predicated region
        $region33: #{tpu_custom_call.1} parent=11 // pred_check
          %p282 = pneg %p182
        $region34: #{tpu_custom_call.1} parent=11 // pred_check_branch
          %284 = sbr.rel (%p282) target = $region36
        $region35: #{tpu_custom_call.1} parent=11 // pred_region
          _
        $region36: #{tpu_custom_call.1} parent=11 // pred_fallthru
          _
        // Predicated region
        $region37: #{tpu_custom_call.1} parent=11 // pred_check
          %p285 = pneg %p203
        $region38: #{tpu_custom_call.1} parent=11 // pred_check_branch
          %287 = sbr.rel (%p285) target = $region40
        $region39: #{tpu_custom_call.1} parent=11 // pred_region
          _
        $region40: #{tpu_custom_call.1} parent=11 // pred_fallthru
          _
        // Predicated region
        $region41: #{tpu_custom_call.1} parent=11 // pred_check
          %p288 = pneg %p224
        $region42: #{tpu_custom_call.1} parent=11 // pred_check_branch
          %290 = sbr.rel (%p288) target = $region44
        $region43: #{tpu_custom_call.1} parent=11 // pred_region
          _
        $region44: #{tpu_custom_call.1} parent=11 // pred_fallthru
          _
      $region12: #{tpu_custom_call.1} parent=5 // pred_fallthru
        _
      %p291 = scmp.lt.s32.totalorder %s18, 4
      // Predicated region
      $region45: #{tpu_custom_call.1} parent=5 // pred_check
        %p292 = pneg %p291
      $region46: #{tpu_custom_call.1} parent=5 // pred_check_branch
        %294 = sbr.rel (%p292) target = $region48
      $region47: #{tpu_custom_call.1} parent=5 // pred_region
        // Predicated region
        $region49: #{tpu_custom_call.1} parent=47 // pred_check
          %p295 = pneg %p50
        $region50: #{tpu_custom_call.1} parent=47 // pred_check_branch
          %297 = sbr.rel (%p295) target = $region52
        $region51: #{tpu_custom_call.1} parent=47 // pred_region
          %p298 = scmp.lt.s32.totalorder %s25, 1
          %s299 = scalar_select %p298, %s25, 1
          %s300 = smul.addr %s299, 60
          %s301 = smul.addr %s300, 8
          %s302 = scalar_lea.vmem %s0, %s301
        $region52: #{tpu_custom_call.1} parent=47 // pred_fallthru
          _
      $region48: #{tpu_custom_call.1} parent=5 // pred_fallthru
        _
      %p303 = scmp.le.s32.totalorder 1, %s18
      %p304 = scmp.lt.s32.totalorder %s18, 5
      %p305 = pnand %p303, %p304
      %p306 = pneg %p305
      // Predicated region
      $region53: #{tpu_custom_call.1} parent=5 // pred_check
        _
      $region54: #{tpu_custom_call.1} parent=5 // pred_check_branch
        %308 = sbr.rel (%p305) target = $region56
      $region55: #{tpu_custom_call.1} parent=5 // pred_region
        %s309 = ssub.s32 %s18, 1
        %p310 = scmp.lt.s32.totalorder %s27, 1
        %s311 = scalar_select %p310, %s27, 1
        %s312 = smul.addr %s311, 60
        %s313 = smul.addr %s312, 8
        %s314 = scalar_lea.vmem %s0, %s313
        %p315 = pneg %p56
        %p316 = pneg %p53
        %p317 = pneg %p77
        %p318 = pneg %p74
        %p319 = pneg %p98
        %p320 = pneg %p95
        %p321 = pneg %p119
        %p322 = pneg %p116
        %p323 = pneg %p140
        %p324 = pneg %p137
        %p325 = pneg %p161
        %p326 = pneg %p158
        %p327 = pneg %p182
        %p328 = pneg %p179
        %p329 = pneg %p203
        %p330 = pneg %p200
        %p331 = pneg %p224
        %p332 = pneg %p221
        %p333 = pneg %p252
        %p334 = pneg %p249
        %s335 = sand.u32 %s239, 1
        %s336 = scalar_lea.sflag [#allocation4], %s335
        %s337 = sand.u32 %s239, 1
        %s338 = smul.addr %s337, 128
        %s339 = scalar_lea.vmem [#allocation3], %s338
        %p340 = scmp.lt.s32.totalorder %s27, 1
        %s341 = scalar_select %p340, %s27, 1
        %s342 = smul.addr %s341, 60
        %s343 = smul.addr %s342, 8
        %s344 = scalar_lea.vmem %s0, %s343
        %s345 = smul.u32 8, %s28
        %s346 = smul.u32 %s28, 8
        %s347 = ssub.s32 %s346, 1
        %s348 = smul.u32 %s346, 24
        %s349 = scalar_lea.vmem %s344, %s348
        %v350 = vld [vmem:[%s349] sm:$0xff]
        %v351 = vld [vmem:[%s349 + $0x8] sm:$0xff]
        %v352 = vld [vmem:[%s349 + $0x18] sm:$0xff]
        %v353 = vld [vmem:[%s349 + $0x20] sm:$0xff]
        %v354 = vld [vmem:[%s349 + $0x30] sm:$0xff]
        %v355 = vld [vmem:[%s349 + $0x38] sm:$0xff]
        %v356 = vld [vmem:[%s349 + $0x48] sm:$0xff]
        %v357 = vld [vmem:[%s349 + $0x50] sm:$0xff]
        %v358 = vld [vmem:[%s349 + $0x60] sm:$0xff]
        %v359 = vld [vmem:[%s349 + $0x68] sm:$0xff]
        %v360 = vld [vmem:[%s349 + $0x78] sm:$0xff]
        %v361 = vld [vmem:[%s349 + $0x80] sm:$0xff]
        %v362 = vld [vmem:[%s349 + $0x90] sm:$0xff]
        %v363 = vld [vmem:[%s349 + $0x98] sm:$0xff]
        %v364 = vld [vmem:[%s349 + $0xa8] sm:$0xff]
        %v365 = vld [vmem:[%s349 + $0xb0] sm:$0xff]
        %v366 = vld [vmem:[%s349 + $0xc0] sm:$0xff]
        %v367 = vld [vmem:[%s349 + $0xc8] sm:$0xff]
        %v368 = vld [vmem:[%s349 + $0xd8] sm:$0xff]
        %v369 = vld [vmem:[%s349 + $0xe0] sm:$0xff]
        %v370 = vld [vmem:[%s1] sm:$0x1]
        %v371 = vperm.slane %v370, 0
        %v372 = vmul.f32 %v350, %v371
        %v373 = vmul.f32 %v351, %v371
        %v374 = vmul.f32 %v352, %v371
        %v375 = vmul.f32 %v353, %v371
        %v376 = vmul.f32 %v354, %v371
        %v377 = vmul.f32 %v355, %v371
        %v378 = vmul.f32 %v356, %v371
        %v379 = vmul.f32 %v357, %v371
        %v380 = vmul.f32 %v358, %v371
        %v381 = vmul.f32 %v359, %v371
        %v382 = vmul.f32 %v360, %v371
        %v383 = vmul.f32 %v361, %v371
        %v384 = vmul.f32 %v362, %v371
        %v385 = vmul.f32 %v363, %v371
        %v386 = vmul.f32 %v364, %v371
        %v387 = vmul.f32 %v365, %v371
        %v388 = vmul.f32 %v366, %v371
        %v389 = vmul.f32 %v367, %v371
        %v390 = vmul.f32 %v368, %v371
        %v391 = vmul.f32 %v369, %v371
        %v392 = vld [vmem:[%s349 + $0x1] sm:$0xff]
        %v393 = vld [vmem:[%s349 + $0x9] sm:$0xff]
        %v394 = vld [vmem:[%s349 + $0x19] sm:$0xff]
        %v395 = vld [vmem:[%s349 + $0x21] sm:$0xff]
        %v396 = vld [vmem:[%s349 + $0x31] sm:$0xff]
        %v397 = vld [vmem:[%s349 + $0x39] sm:$0xff]
        %v398 = vld [vmem:[%s349 + $0x49] sm:$0xff]
        %v399 = vld [vmem:[%s349 + $0x51] sm:$0xff]
        %v400 = vld [vmem:[%s349 + $0x61] sm:$0xff]
        %v401 = vld [vmem:[%s349 + $0x69] sm:$0xff]
        %v402 = vld [vmem:[%s349 + $0x79] sm:$0xff]
        %v403 = vld [vmem:[%s349 + $0x81] sm:$0xff]
        %v404 = vld [vmem:[%s349 + $0x91] sm:$0xff]
        %v405 = vld [vmem:[%s349 + $0x99] sm:$0xff]
        %v406 = vld [vmem:[%s349 + $0xa9] sm:$0xff]
        %v407 = vld [vmem:[%s349 + $0xb1] sm:$0xff]
        %v408 = vld [vmem:[%s349 + $0xc1] sm:$0xff]
        %v409 = vld [vmem:[%s349 + $0xc9] sm:$0xff]
        %v410 = vld [vmem:[%s349 + $0xd9] sm:$0xff]
        %v411 = vld [vmem:[%s349 + $0xe1] sm:$0xff]
        %v412 = vld [vmem:[%s1 + $0x1] sm:$0x1]
        %v413 = vperm.slane %v412, 0
        %v414 = vmul.f32 %v392, %v413
        %v415 = vmul.f32 %v393, %v413
        %v416 = vmul.f32 %v394, %v413
        %v417 = vmul.f32 %v395, %v413
        %v418 = vmul.f32 %v396, %v413
        %v419 = vmul.f32 %v397, %v413
        %v420 = vmul.f32 %v398, %v413
        %v421 = vmul.f32 %v399, %v413
        %v422 = vmul.f32 %v400, %v413
        %v423 = vmul.f32 %v401, %v413
        %v424 = vmul.f32 %v402, %v413
        %v425 = vmul.f32 %v403, %v413
        %v426 = vmul.f32 %v404, %v413
        %v427 = vmul.f32 %v405, %v413
        %v428 = vmul.f32 %v406, %v413
        %v429 = vmul.f32 %v407, %v413
        %v430 = vmul.f32 %v408, %v413
        %v431 = vmul.f32 %v409, %v413
        %v432 = vmul.f32 %v410, %v413
        %v433 = vmul.f32 %v411, %v413
        %v434 = vld [vmem:[%s349 + $0x2] sm:$0xff]
        %v435 = vld [vmem:[%s349 + $0xa] sm:$0xff]
        %v436 = vld [vmem:[%s349 + $0x1a] sm:$0xff]
        %v437 = vld [vmem:[%s349 + $0x22] sm:$0xff]
        %v438 = vld [vmem:[%s349 + $0x32] sm:$0xff]
        %v439 = vld [vmem:[%s349 + $0x3a] sm:$0xff]
        %v440 = vld [vmem:[%s349 + $0x4a] sm:$0xff]
        %v441 = vld [vmem:[%s349 + $0x52] sm:$0xff]
        %v442 = vld [vmem:[%s349 + $0x62] sm:$0xff]
        %v443 = vld [vmem:[%s349 + $0x6a] sm:$0xff]
        %v444 = vld [vmem:[%s349 + $0x7a] sm:$0xff]
        %v445 = vld [vmem:[%s349 + $0x82] sm:$0xff]
        %v446 = vld [vmem:[%s349 + $0x92] sm:$0xff]
        %v447 = vld [vmem:[%s349 + $0x9a] sm:$0xff]
        %v448 = vld [vmem:[%s349 + $0xaa] sm:$0xff]
        %v449 = vld [vmem:[%s349 + $0xb2] sm:$0xff]
        %v450 = vld [vmem:[%s349 + $0xc2] sm:$0xff]
        %v451 = vld [vmem:[%s349 + $0xca] sm:$0xff]
        %v452 = vld [vmem:[%s349 + $0xda] sm:$0xff]
        %v453 = vld [vmem:[%s349 + $0xe2] sm:$0xff]
        %v454 = vld [vmem:[%s1 + $0x2] sm:$0x1]
        %v455 = vperm.slane %v454, 0
        %v456 = vmul.f32 %v434, %v455
        %v457 = vmul.f32 %v435, %v455
        %v458 = vmul.f32 %v436, %v455
        %v459 = vmul.f32 %v437, %v455
        %v460 = vmul.f32 %v438, %v455
        %v461 = vmul.f32 %v439, %v455
        %v462 = vmul.f32 %v440, %v455
        %v463 = vmul.f32 %v441, %v455
        %v464 = vmul.f32 %v442, %v455
        %v465 = vmul.f32 %v443, %v455
        %v466 = vmul.f32 %v444, %v455
        %v467 = vmul.f32 %v445, %v455
        %v468 = vmul.f32 %v446, %v455
        %v469 = vmul.f32 %v447, %v455
        %v470 = vmul.f32 %v448, %v455
        %v471 = vmul.f32 %v449, %v455
        %v472 = vmul.f32 %v450, %v455
        %v473 = vmul.f32 %v451, %v455
        %v474 = vmul.f32 %v452, %v455
        %v475 = vmul.f32 %v453, %v455
        %s476 = sadd.s32 %s346, 1
        %s477 = smul.u32 %s476, 24
        %s478 = scalar_lea.vmem %s344, %s477
        %v479 = vld [vmem:[%s478] sm:$0xff]
        %v480 = vld [vmem:[%s478 + $0x8] sm:$0xff]
        %v481 = vld [vmem:[%s478 + $0x18] sm:$0xff]
        %v482 = vld [vmem:[%s478 + $0x20] sm:$0xff]
        %v483 = vld [vmem:[%s478 + $0x30] sm:$0xff]
        %v484 = vld [vmem:[%s478 + $0x38] sm:$0xff]
        %v485 = vld [vmem:[%s478 + $0x48] sm:$0xff]
        %v486 = vld [vmem:[%s478 + $0x50] sm:$0xff]
        %v487 = vld [vmem:[%s478 + $0x60] sm:$0xff]
        %v488 = vld [vmem:[%s478 + $0x68] sm:$0xff]
        %v489 = vld [vmem:[%s478 + $0x78] sm:$0xff]
        %v490 = vld [vmem:[%s478 + $0x80] sm:$0xff]
        %v491 = vld [vmem:[%s478 + $0x90] sm:$0xff]
        %v492 = vld [vmem:[%s478 + $0x98] sm:$0xff]
        %v493 = vld [vmem:[%s478 + $0xa8] sm:$0xff]
        %v494 = vld [vmem:[%s478 + $0xb0] sm:$0xff]
        %v495 = vld [vmem:[%s478 + $0xc0] sm:$0xff]
        %v496 = vld [vmem:[%s478 + $0xc8] sm:$0xff]
        %v497 = vld [vmem:[%s478 + $0xd8] sm:$0xff]
        %v498 = vld [vmem:[%s478 + $0xe0] sm:$0xff]
        %v499 = vld [vmem:[%s1 + $0x3] sm:$0x1]
        %v500 = vperm.slane %v499, 0
        %v501 = vmul.f32 %v479, %v500
        %v502 = vmul.f32 %v480, %v500
        %v503 = vmul.f32 %v481, %v500
        %v504 = vmul.f32 %v482, %v500
        %v505 = vmul.f32 %v483, %v500
        %v506 = vmul.f32 %v484, %v500
        %v507 = vmul.f32 %v485, %v500
        %v508 = vmul.f32 %v486, %v500
        %v509 = vmul.f32 %v487, %v500
        %v510 = vmul.f32 %v488, %v500
        %v511 = vmul.f32 %v489, %v500
        %v512 = vmul.f32 %v490, %v500
        %v513 = vmul.f32 %v491, %v500
        %v514 = vmul.f32 %v492, %v500
        %v515 = vmul.f32 %v493, %v500
        %v516 = vmul.f32 %v494, %v500
        %v517 = vmul.f32 %v495, %v500
        %v518 = vmul.f32 %v496, %v500
        %v519 = vmul.f32 %v497, %v500
        %v520 = vmul.f32 %v498, %v500
        %v521 = vld [vmem:[%s478 + $0x1] sm:$0xff]
        %v522 = vld [vmem:[%s478 + $0x9] sm:$0xff]
        %v523 = vld [vmem:[%s478 + $0x19] sm:$0xff]
        %v524 = vld [vmem:[%s478 + $0x21] sm:$0xff]
        %v525 = vld [vmem:[%s478 + $0x31] sm:$0xff]
        %v526 = vld [vmem:[%s478 + $0x39] sm:$0xff]
        %v527 = vld [vmem:[%s478 + $0x49] sm:$0xff]
        %v528 = vld [vmem:[%s478 + $0x51] sm:$0xff]
        %v529 = vld [vmem:[%s478 + $0x61] sm:$0xff]
        %v530 = vld [vmem:[%s478 + $0x69] sm:$0xff]
        %v531 = vld [vmem:[%s478 + $0x79] sm:$0xff]
        %v532 = vld [vmem:[%s478 + $0x81] sm:$0xff]
        %v533 = vld [vmem:[%s478 + $0x91] sm:$0xff]
        %v534 = vld [vmem:[%s478 + $0x99] sm:$0xff]
        %v535 = vld [vmem:[%s478 + $0xa9] sm:$0xff]
        %v536 = vld [vmem:[%s478 + $0xb1] sm:$0xff]
        %v537 = vld [vmem:[%s478 + $0xc1] sm:$0xff]
        %v538 = vld [vmem:[%s478 + $0xc9] sm:$0xff]
        %v539 = vld [vmem:[%s478 + $0xd9] sm:$0xff]
        %v540 = vld [vmem:[%s478 + $0xe1] sm:$0xff]
        %v541 = vld [vmem:[%s1 + $0x4] sm:$0x1]
        %v542 = vperm.slane %v541, 0
        %v543 = vmul.f32 %v521, %v542
        %v544 = vmul.f32 %v522, %v542
        %v545 = vmul.f32 %v523, %v542
        %v546 = vmul.f32 %v524, %v542
        %v547 = vmul.f32 %v525, %v542
        %v548 = vmul.f32 %v526, %v542
        %v549 = vmul.f32 %v527, %v542
        %v550 = vmul.f32 %v528, %v542
        %v551 = vmul.f32 %v529, %v542
        %v552 = vmul.f32 %v530, %v542
        %v553 = vmul.f32 %v531, %v542
        %v554 = vmul.f32 %v532, %v542
        %v555 = vmul.f32 %v533, %v542
        %v556 = vmul.f32 %v534, %v542
        %v557 = vmul.f32 %v535, %v542
        %v558 = vmul.f32 %v536, %v542
        %v559 = vmul.f32 %v537, %v542
        %v560 = vmul.f32 %v538, %v542
        %v561 = vmul.f32 %v539, %v542
        %v562 = vmul.f32 %v540, %v542
        %v563 = vld [vmem:[%s478 + $0x2] sm:$0xff]
        %v564 = vld [vmem:[%s478 + $0xa] sm:$0xff]
        %v565 = vld [vmem:[%s478 + $0x1a] sm:$0xff]
        %v566 = vld [vmem:[%s478 + $0x22] sm:$0xff]
        %v567 = vld [vmem:[%s478 + $0x32] sm:$0xff]
        %v568 = vld [vmem:[%s478 + $0x3a] sm:$0xff]
        %v569 = vld [vmem:[%s478 + $0x4a] sm:$0xff]
        %v570 = vld [vmem:[%s478 + $0x52] sm:$0xff]
        %v571 = vld [vmem:[%s478 + $0x62] sm:$0xff]
        %v572 = vld [vmem:[%s478 + $0x6a] sm:$0xff]
        %v573 = vld [vmem:[%s478 + $0x7a] sm:$0xff]
        %v574 = vld [vmem:[%s478 + $0x82] sm:$0xff]
        %v575 = vld [vmem:[%s478 + $0x92] sm:$0xff]
        %v576 = vld [vmem:[%s478 + $0x9a] sm:$0xff]
        %v577 = vld [vmem:[%s478 + $0xaa] sm:$0xff]
        %v578 = vld [vmem:[%s478 + $0xb2] sm:$0xff]
        %v579 = vld [vmem:[%s478 + $0xc2] sm:$0xff]
        %v580 = vld [vmem:[%s478 + $0xca] sm:$0xff]
        %v581 = vld [vmem:[%s478 + $0xda] sm:$0xff]
        %v582 = vld [vmem:[%s478 + $0xe2] sm:$0xff]
        %v583 = vld [vmem:[%s1 + $0x5] sm:$0x1]
        %v584 = vperm.slane %v583, 0
        %v585 = vmul.f32 %v563, %v584
        %v586 = vmul.f32 %v564, %v584
        %v587 = vmul.f32 %v565, %v584
        %v588 = vmul.f32 %v566, %v584
        %v589 = vmul.f32 %v567, %v584
        %v590 = vmul.f32 %v568, %v584
        %v591 = vmul.f32 %v569, %v584
        %v592 = vmul.f32 %v570, %v584
        %v593 = vmul.f32 %v571, %v584
        %v594 = vmul.f32 %v572, %v584
        %v595 = vmul.f32 %v573, %v584
        %v596 = vmul.f32 %v574, %v584
        %v597 = vmul.f32 %v575, %v584
        %v598 = vmul.f32 %v576, %v584
        %v599 = vmul.f32 %v577, %v584
        %v600 = vmul.f32 %v578, %v584
        %v601 = vmul.f32 %v579, %v584
        %v602 = vmul.f32 %v580, %v584
        %v603 = vmul.f32 %v581, %v584
        %v604 = vmul.f32 %v582, %v584
        %s605 = sadd.s32 %s346, 2
        %s606 = smul.u32 %s605, 24
        %s607 = scalar_lea.vmem %s344, %s606
        %v608 = vld [vmem:[%s607] sm:$0xff]
        %v609 = vld [vmem:[%s607 + $0x8] sm:$0xff]
        %v610 = vld [vmem:[%s607 + $0x18] sm:$0xff]
        %v611 = vld [vmem:[%s607 + $0x20] sm:$0xff]
        %v612 = vld [vmem:[%s607 + $0x30] sm:$0xff]
        %v613 = vld [vmem:[%s607 + $0x38] sm:$0xff]
        %v614 = vld [vmem:[%s607 + $0x48] sm:$0xff]
        %v615 = vld [vmem:[%s607 + $0x50] sm:$0xff]
        %v616 = vld [vmem:[%s607 + $0x60] sm:$0xff]
        %v617 = vld [vmem:[%s607 + $0x68] sm:$0xff]
        %v618 = vld [vmem:[%s607 + $0x78] sm:$0xff]
        %v619 = vld [vmem:[%s607 + $0x80] sm:$0xff]
        %v620 = vld [vmem:[%s607 + $0x90] sm:$0xff]
        %v621 = vld [vmem:[%s607 + $0x98] sm:$0xff]
        %v622 = vld [vmem:[%s607 + $0xa8] sm:$0xff]
        %v623 = vld [vmem:[%s607 + $0xb0] sm:$0xff]
        %v624 = vld [vmem:[%s607 + $0xc0] sm:$0xff]
        %v625 = vld [vmem:[%s607 + $0xc8] sm:$0xff]
        %v626 = vld [vmem:[%s607 + $0xd8] sm:$0xff]
        %v627 = vld [vmem:[%s607 + $0xe0] sm:$0xff]
        %v628 = vld [vmem:[%s1 + $0x6] sm:$0x1]
        %v629 = vperm.slane %v628, 0
        %v630 = vmul.f32 %v608, %v629
        %v631 = vmul.f32 %v609, %v629
        %v632 = vmul.f32 %v610, %v629
        %v633 = vmul.f32 %v611, %v629
        %v634 = vmul.f32 %v612, %v629
        %v635 = vmul.f32 %v613, %v629
        %v636 = vmul.f32 %v614, %v629
        %v637 = vmul.f32 %v615, %v629
        %v638 = vmul.f32 %v616, %v629
        %v639 = vmul.f32 %v617, %v629
        %v640 = vmul.f32 %v618, %v629
        %v641 = vmul.f32 %v619, %v629
        %v642 = vmul.f32 %v620, %v629
        %v643 = vmul.f32 %v621, %v629
        %v644 = vmul.f32 %v622, %v629
        %v645 = vmul.f32 %v623, %v629
        %v646 = vmul.f32 %v624, %v629
        %v647 = vmul.f32 %v625, %v629
        %v648 = vmul.f32 %v626, %v629
        %v649 = vmul.f32 %v627, %v629
        %v650 = vld [vmem:[%s607 + $0x1] sm:$0xff]
        %v651 = vld [vmem:[%s607 + $0x9] sm:$0xff]
        %v652 = vld [vmem:[%s607 + $0x19] sm:$0xff]
        %v653 = vld [vmem:[%s607 + $0x21] sm:$0xff]
        %v654 = vld [vmem:[%s607 + $0x31] sm:$0xff]
        %v655 = vld [vmem:[%s607 + $0x39] sm:$0xff]
        %v656 = vld [vmem:[%s607 + $0x49] sm:$0xff]
        %v657 = vld [vmem:[%s607 + $0x51] sm:$0xff]
        %v658 = vld [vmem:[%s607 + $0x61] sm:$0xff]
        %v659 = vld [vmem:[%s607 + $0x69] sm:$0xff]
        %v660 = vld [vmem:[%s607 + $0x79] sm:$0xff]
        %v661 = vld [vmem:[%s607 + $0x81] sm:$0xff]
        %v662 = vld [vmem:[%s607 + $0x91] sm:$0xff]
        %v663 = vld [vmem:[%s607 + $0x99] sm:$0xff]
        %v664 = vld [vmem:[%s607 + $0xa9] sm:$0xff]
        %v665 = vld [vmem:[%s607 + $0xb1] sm:$0xff]
        %v666 = vld [vmem:[%s607 + $0xc1] sm:$0xff]
        %v667 = vld [vmem:[%s607 + $0xc9] sm:$0xff]
        %v668 = vld [vmem:[%s607 + $0xd9] sm:$0xff]
        %v669 = vld [vmem:[%s607 + $0xe1] sm:$0xff]
        %v670 = vld [vmem:[%s1 + $0x7] sm:$0x1]
        %v671 = vperm.slane %v670, 0
        %v672 = vmul.f32 %v650, %v671
        %v673 = vmul.f32 %v651, %v671
        %v674 = vmul.f32 %v652, %v671
        %v675 = vmul.f32 %v653, %v671
        %v676 = vmul.f32 %v654, %v671
        %v677 = vmul.f32 %v655, %v671
        %v678 = vmul.f32 %v656, %v671
        %v679 = vmul.f32 %v657, %v671
        %v680 = vmul.f32 %v658, %v671
        %v681 = vmul.f32 %v659, %v671
        %v682 = vmul.f32 %v660, %v671
        %v683 = vmul.f32 %v661, %v671
        %v684 = vmul.f32 %v662, %v671
        %v685 = vmul.f32 %v663, %v671
        %v686 = vmul.f32 %v664, %v671
        %v687 = vmul.f32 %v665, %v671
        %v688 = vmul.f32 %v666, %v671
        %v689 = vmul.f32 %v667, %v671
        %v690 = vmul.f32 %v668, %v671
        %v691 = vmul.f32 %v669, %v671
        %v692 = vld [vmem:[%s607 + $0x2] sm:$0xff]
        %v693 = vld [vmem:[%s607 + $0xa] sm:$0xff]
        %v694 = vld [vmem:[%s607 + $0x1a] sm:$0xff]
        %v695 = vld [vmem:[%s607 + $0x22] sm:$0xff]
        %v696 = vld [vmem:[%s607 + $0x32] sm:$0xff]
        %v697 = vld [vmem:[%s607 + $0x3a] sm:$0xff]
        %v698 = vld [vmem:[%s607 + $0x4a] sm:$0xff]
        %v699 = vld [vmem:[%s607 + $0x52] sm:$0xff]
        %v700 = vld [vmem:[%s607 + $0x62] sm:$0xff]
        %v701 = vld [vmem:[%s607 + $0x6a] sm:$0xff]
        %v702 = vld [vmem:[%s607 + $0x7a] sm:$0xff]
        %v703 = vld [vmem:[%s607 + $0x82] sm:$0xff]
        %v704 = vld [vmem:[%s607 + $0x92] sm:$0xff]
        %v705 = vld [vmem:[%s607 + $0x9a] sm:$0xff]
        %v706 = vld [vmem:[%s607 + $0xaa] sm:$0xff]
        %v707 = vld [vmem:[%s607 + $0xb2] sm:$0xff]
        %v708 = vld [vmem:[%s607 + $0xc2] sm:$0xff]
        %v709 = vld [vmem:[%s607 + $0xca] sm:$0xff]
        %v710 = vld [vmem:[%s607 + $0xda] sm:$0xff]
        %v711 = vld [vmem:[%s607 + $0xe2] sm:$0xff]
        %v712 = vld [vmem:[%s1 + $0x8] sm:$0x1]
        %v713 = vperm.slane %v712, 0
        %v714 = vmul.f32 %v692, %v713
        %v715 = vmul.f32 %v693, %v713
        %v716 = vmul.f32 %v694, %v713
        %v717 = vmul.f32 %v695, %v713
        %v718 = vmul.f32 %v696, %v713
        %v719 = vmul.f32 %v697, %v713
        %v720 = vmul.f32 %v698, %v713
        %v721 = vmul.f32 %v699, %v713
        %v722 = vmul.f32 %v700, %v713
        %v723 = vmul.f32 %v701, %v713
        %v724 = vmul.f32 %v702, %v713
        %v725 = vmul.f32 %v703, %v713
        %v726 = vmul.f32 %v704, %v713
        %v727 = vmul.f32 %v705, %v713
        %v728 = vmul.f32 %v706, %v713
        %v729 = vmul.f32 %v707, %v713
        %v730 = vmul.f32 %v708, %v713
        %v731 = vmul.f32 %v709, %v713
        %v732 = vmul.f32 %v710, %v713
        %v733 = vmul.f32 %v711, %v713
        %v734 = vadd.f32 %v372, %v414
        %v735 = vadd.f32 %v373, %v415
        %v736 = vadd.f32 %v374, %v416
        %v737 = vadd.f32 %v375, %v417
        %v738 = vadd.f32 %v376, %v418
        %v739 = vadd.f32 %v377, %v419
        %v740 = vadd.f32 %v378, %v420
        %v741 = vadd.f32 %v379, %v421
        %v742 = vadd.f32 %v380, %v422
        %v743 = vadd.f32 %v381, %v423
        %v744 = vadd.f32 %v382, %v424
        %v745 = vadd.f32 %v383, %v425
        %v746 = vadd.f32 %v384, %v426
        %v747 = vadd.f32 %v385, %v427
        %v748 = vadd.f32 %v386, %v428
        %v749 = vadd.f32 %v387, %v429
        %v750 = vadd.f32 %v388, %v430
        %v751 = vadd.f32 %v389, %v431
        %v752 = vadd.f32 %v390, %v432
        %v753 = vadd.f32 %v391, %v433
        %v754 = vadd.f32 %v456, %v501
        %v755 = vadd.f32 %v457, %v502
        %v756 = vadd.f32 %v458, %v503
        %v757 = vadd.f32 %v459, %v504
        %v758 = vadd.f32 %v460, %v505
        %v759 = vadd.f32 %v461, %v506
        %v760 = vadd.f32 %v462, %v507
        %v761 = vadd.f32 %v463, %v508
        %v762 = vadd.f32 %v464, %v509
        %v763 = vadd.f32 %v465, %v510
        %v764 = vadd.f32 %v466, %v511
        %v765 = vadd.f32 %v467, %v512
        %v766 = vadd.f32 %v468, %v513
        %v767 = vadd.f32 %v469, %v514
        %v768 = vadd.f32 %v470, %v515
        %v769 = vadd.f32 %v471, %v516
        %v770 = vadd.f32 %v472, %v517
        %v771 = vadd.f32 %v473, %v518
        %v772 = vadd.f32 %v474, %v519
        %v773 = vadd.f32 %v475, %v520
        %v774 = vadd.f32 %v543, %v585
        %v775 = vadd.f32 %v544, %v586
        %v776 = vadd.f32 %v545, %v587
        %v777 = vadd.f32 %v546, %v588
        %v778 = vadd.f32 %v547, %v589
        %v779 = vadd.f32 %v548, %v590
        %v780 = vadd.f32 %v549, %v591
        %v781 = vadd.f32 %v550, %v592
        %v782 = vadd.f32 %v551, %v593
        %v783 = vadd.f32 %v552, %v594
        %v784 = vadd.f32 %v553, %v595
        %v785 = vadd.f32 %v554, %v596
        %v786 = vadd.f32 %v555, %v597
        %v787 = vadd.f32 %v556, %v598
        %v788 = vadd.f32 %v557, %v599
        %v789 = vadd.f32 %v558, %v600
        %v790 = vadd.f32 %v559, %v601
        %v791 = vadd.f32 %v560, %v602
        %v792 = vadd.f32 %v561, %v603
        %v793 = vadd.f32 %v562, %v604
        %v794 = vadd.f32 %v630, %v672
        %v795 = vadd.f32 %v631, %v673
        %v796 = vadd.f32 %v632, %v674
        %v797 = vadd.f32 %v633, %v675
        %v798 = vadd.f32 %v634, %v676
        %v799 = vadd.f32 %v635, %v677
        %v800 = vadd.f32 %v636, %v678
        %v801 = vadd.f32 %v637, %v679
        %v802 = vadd.f32 %v638, %v680
        %v803 = vadd.f32 %v639, %v681
        %v804 = vadd.f32 %v640, %v682
        %v805 = vadd.f32 %v641, %v683
        %v806 = vadd.f32 %v642, %v684
        %v807 = vadd.f32 %v643, %v685
        %v808 = vadd.f32 %v644, %v686
        %v809 = vadd.f32 %v645, %v687
        %v810 = vadd.f32 %v646, %v688
        %v811 = vadd.f32 %v647, %v689
        %v812 = vadd.f32 %v648, %v690
        %v813 = vadd.f32 %v649, %v691
        %v814 = vadd.f32 %v734, %v754
        %v815 = vadd.f32 %v735, %v755
        %v816 = vadd.f32 %v736, %v756
        %v817 = vadd.f32 %v737, %v757
        %v818 = vadd.f32 %v738, %v758
        %v819 = vadd.f32 %v739, %v759
        %v820 = vadd.f32 %v740, %v760
        %v821 = vadd.f32 %v741, %v761
        %v822 = vadd.f32 %v742, %v762
        %v823 = vadd.f32 %v743, %v763
        %v824 = vadd.f32 %v744, %v764
        %v825 = vadd.f32 %v745, %v765
        %v826 = vadd.f32 %v746, %v766
        %v827 = vadd.f32 %v747, %v767
        %v828 = vadd.f32 %v748, %v768
        %v829 = vadd.f32 %v749, %v769
        %v830 = vadd.f32 %v750, %v770
        %v831 = vadd.f32 %v751, %v771
        %v832 = vadd.f32 %v752, %v772
        %v833 = vadd.f32 %v753, %v773
        %v834 = vadd.f32 %v774, %v794
        %v835 = vadd.f32 %v775, %v795
        %v836 = vadd.f32 %v776, %v796
        %v837 = vadd.f32 %v777, %v797
        %v838 = vadd.f32 %v778, %v798
        %v839 = vadd.f32 %v779, %v799
        %v840 = vadd.f32 %v780, %v800
        %v841 = vadd.f32 %v781, %v801
        %v842 = vadd.f32 %v782, %v802
        %v843 = vadd.f32 %v783, %v803
        %v844 = vadd.f32 %v784, %v804
        %v845 = vadd.f32 %v785, %v805
        %v846 = vadd.f32 %v786, %v806
        %v847 = vadd.f32 %v787, %v807
        %v848 = vadd.f32 %v788, %v808
        %v849 = vadd.f32 %v789, %v809
        %v850 = vadd.f32 %v790, %v810
        %v851 = vadd.f32 %v791, %v811
        %v852 = vadd.f32 %v792, %v812
        %v853 = vadd.f32 %v793, %v813
        %v854 = vadd.f32 %v814, %v834
        %v855 = vadd.f32 %v815, %v835
        %v856 = vadd.f32 %v816, %v836
        %v857 = vadd.f32 %v817, %v837
        %v858 = vadd.f32 %v818, %v838
        %v859 = vadd.f32 %v819, %v839
        %v860 = vadd.f32 %v820, %v840
        %v861 = vadd.f32 %v821, %v841
        %v862 = vadd.f32 %v822, %v842
        %v863 = vadd.f32 %v823, %v843
        %v864 = vadd.f32 %v824, %v844
        %v865 = vadd.f32 %v825, %v845
        %v866 = vadd.f32 %v826, %v846
        %v867 = vadd.f32 %v827, %v847
        %v868 = vadd.f32 %v828, %v848
        %v869 = vadd.f32 %v829, %v849
        %v870 = vadd.f32 %v830, %v850
        %v871 = vadd.f32 %v831, %v851
        %v872 = vadd.f32 %v832, %v852
        %v873 = vadd.f32 %v833, %v853
        %v874 = vadd.f32 %v854, %v714
        %v875 = vadd.f32 %v855, %v715
        %v876 = vadd.f32 %v856, %v716
        %v877 = vadd.f32 %v857, %v717
        %v878 = vadd.f32 %v858, %v718
        %v879 = vadd.f32 %v859, %v719
        %v880 = vadd.f32 %v860, %v720
        %v881 = vadd.f32 %v861, %v721
        %v882 = vadd.f32 %v862, %v722
        %v883 = vadd.f32 %v863, %v723
        %v884 = vadd.f32 %v864, %v724
        %v885 = vadd.f32 %v865, %v725
        %v886 = vadd.f32 %v866, %v726
        %v887 = vadd.f32 %v867, %v727
        %v888 = vadd.f32 %v868, %v728
        %v889 = vadd.f32 %v869, %v729
        %v890 = vadd.f32 %v870, %v730
        %v891 = vadd.f32 %v871, %v731
        %v892 = vadd.f32 %v872, %v732
        %v893 = vadd.f32 %v873, %v733
        %v894 = vld [vmem:[%s2] sm:$0x1]
        %v896 = vperm.slane %v894, 0
        %v898 = vadd.f32 %v874, %v896
        %v899 = vadd.f32 %v875, %v896
        %v900 = vadd.f32 %v876, %v896
        %v901 = vadd.f32 %v877, %v896
        %v902 = vadd.f32 %v878, %v896
        %v903 = vadd.f32 %v879, %v896
        %v904 = vadd.f32 %v880, %v896
        %v905 = vadd.f32 %v881, %v896
        %v906 = vadd.f32 %v882, %v896
        %v907 = vadd.f32 %v883, %v896
        %v908 = vadd.f32 %v884, %v896
        %v909 = vadd.f32 %v885, %v896
        %v910 = vadd.f32 %v886, %v896
        %v911 = vadd.f32 %v887, %v896
        %v912 = vadd.f32 %v888, %v896
        %v913 = vadd.f32 %v889, %v896
        %v914 = vadd.f32 %v890, %v896
        %v915 = vadd.f32 %v891, %v896
        %v916 = vadd.f32 %v892, %v896
        %v917 = vadd.f32 %v893, %v896
        %v918 = vld [vmem:[%s3] sm:$0xff]
        %v919 = vld [vmem:[%s3 + $0x8] sm:$0xff]
        %v920 = vld [vmem:[%s4] sm:$0x1]
        %v922 = vperm.slane %v920, 0
        %vm924 = vcmask 130048
        %v926 = vsel %vm924, %v898, 0
        %v929 = vsel %vm924, %v899, 0
        %v932 = vsel %vm924, %v900, 0
        %v935 = vsel %vm924, %v901, 0
        %v938 = vsel %vm924, %v902, 0
        %v941 = vsel %vm924, %v903, 0
        %v944 = vsel %vm924, %v904, 0
        %v947 = vsel %vm924, %v905, 0
        %v950 = vsel %vm924, %v906, 0
        %v953 = vsel %vm924, %v907, 0
        %v956 = vsel %vm924, %v908, 0
        %v959 = vsel %vm924, %v909, 0
        %v962 = vsel %vm924, %v910, 0
        %v965 = vsel %vm924, %v911, 0
        %v968 = vsel %vm924, %v912, 0
        %v971 = vsel %vm924, %v913, 0
        %v974 = vsel %vm924, %v914, 0
        %v977 = vsel %vm924, %v915, 0
        %v980 = vsel %vm924, %v916, 0
        %v983 = vsel %vm924, %v917, 0
        %985 = vmatpush.msra.mxu0 0.0
        %986 = vmatpush.msra.mxu0 0.0
        %987 = vmatpush.msra.mxu0 0.0
        %988 = vmatpush.msra.mxu0 0.0
        %989 = vmatpush.msra.mxu0 0.0
        %990 = vmatpush.msra.mxu0 0.0
        %991 = vmatpush.msra.mxu0 0.0
        %992 = vmatpush.msra.mxu0 0.0
        %993 = vmatpush.msra.mxu0 0.0
        %994 = vmatpush.msra.mxu0 0.0
        %995 = vmatpush.msra.mxu0 0.0
        %996 = vmatpush.msra.mxu0 0.0
        %997 = vmatpush.msra.mxu0 0.0
        %998 = vmatpush.msra.mxu0 0.0
        %999 = vmatpush.msra.mxu0 %v919
        %1000 = vmatpush.msra.mxu0 %v918
        %1001 = vmatmul.f32.gmra.mxu0 %v926
        %v1002 = vpop.f32.mrf.mxu0
        %v1003 = vadd.f32 %v922, %v1002
        %1004 = vmatmul.f32.gmra.mxu0 %v929
        %v1005 = vpop.f32.mrf.mxu0
        %v1006 = vadd.f32 %v922, %v1005
        %1007 = vmatmul.f32.gmra.mxu0 %v932
        %v1008 = vpop.f32.mrf.mxu0
        %v1009 = vadd.f32 %v922, %v1008
        %1010 = vmatmul.f32.gmra.mxu0 %v935
        %v1011 = vpop.f32.mrf.mxu0
        %v1012 = vadd.f32 %v922, %v1011
        %1013 = vmatmul.f32.gmra.mxu0 %v938
        %v1014 = vpop.f32.mrf.mxu0
        %v1015 = vadd.f32 %v922, %v1014
        %1016 = vmatmul.f32.gmra.mxu0 %v941
        %v1017 = vpop.f32.mrf.mxu0
        %v1018 = vadd.f32 %v922, %v1017
        %1019 = vmatmul.f32.gmra.mxu0 %v944
        %v1020 = vpop.f32.mrf.mxu0
        %v1021 = vadd.f32 %v922, %v1020
        %1022 = vmatmul.f32.gmra.mxu0 %v947
        %v1023 = vpop.f32.mrf.mxu0
        %v1024 = vadd.f32 %v922, %v1023
        %1025 = vmatmul.f32.gmra.mxu0 %v950
        %v1026 = vpop.f32.mrf.mxu0
        %v1027 = vadd.f32 %v922, %v1026
        %1028 = vmatmul.f32.gmra.mxu0 %v953
        %v1029 = vpop.f32.mrf.mxu0
        %v1030 = vadd.f32 %v922, %v1029
        %1031 = vmatmul.f32.gmra.mxu0 %v956
        %v1032 = vpop.f32.mrf.mxu0
        %v1033 = vadd.f32 %v922, %v1032
        %1034 = vmatmul.f32.gmra.mxu0 %v959
        %v1035 = vpop.f32.mrf.mxu0
        %v1036 = vadd.f32 %v922, %v1035
        %1037 = vmatmul.f32.gmra.mxu0 %v962
        %v1038 = vpop.f32.mrf.mxu0
        %v1039 = vadd.f32 %v922, %v1038
        %1040 = vmatmul.f32.gmra.mxu0 %v965
        %v1041 = vpop.f32.mrf.mxu0
        %v1042 = vadd.f32 %v922, %v1041
        %1043 = vmatmul.f32.gmra.mxu0 %v968
        %v1044 = vpop.f32.mrf.mxu0
        %v1045 = vadd.f32 %v922, %v1044
        %1046 = vmatmul.f32.gmra.mxu0 %v971
        %v1047 = vpop.f32.mrf.mxu0
        %v1048 = vadd.f32 %v922, %v1047
        %1049 = vmatmul.f32.gmra.mxu0 %v974
        %v1050 = vpop.f32.mrf.mxu0
        %v1051 = vadd.f32 %v922, %v1050
        %1052 = vmatmul.f32.gmra.mxu0 %v977
        %v1053 = vpop.f32.mrf.mxu0
        %v1054 = vadd.f32 %v922, %v1053
        %1055 = vmatmul.f32.gmra.mxu0 %v980
        %v1056 = vpop.f32.mrf.mxu0
        %v1057 = vadd.f32 %v922, %v1056
        %1058 = vmatmul.f32.gmra.mxu0 %v983
        %v1059 = vpop.f32.mrf.mxu0
        %v1060 = vadd.f32 %v922, %v1059
        %1061 = vdwg.mxu0
        %v1062 = vmax.f32 %v1003, 0.0
        %v1063 = vmax.f32 %v1006, 0.0
        %v1064 = vmax.f32 %v1009, 0.0
        %v1065 = vmax.f32 %v1012, 0.0
        %v1066 = vmax.f32 %v1015, 0.0
        %v1067 = vmax.f32 %v1018, 0.0
        %v1068 = vmax.f32 %v1021, 0.0
        %v1069 = vmax.f32 %v1024, 0.0
        %v1070 = vmax.f32 %v1027, 0.0
        %v1071 = vmax.f32 %v1030, 0.0
        %v1072 = vmax.f32 %v1033, 0.0
        %v1073 = vmax.f32 %v1036, 0.0
        %v1074 = vmax.f32 %v1039, 0.0
        %v1075 = vmax.f32 %v1042, 0.0
        %v1076 = vmax.f32 %v1045, 0.0
        %v1077 = vmax.f32 %v1048, 0.0
        %v1078 = vmax.f32 %v1051, 0.0
        %v1079 = vmax.f32 %v1054, 0.0
        %v1080 = vmax.f32 %v1057, 0.0
        %v1081 = vmax.f32 %v1060, 0.0
        %v1082 = vstv %s347
        %v1083 = vadd.s32 %v1082, 1
        %v1084 = vadd.s32 %v1082, 2
        %v1085 = vadd.s32 %v1082, 3
        %v1086 = vadd.s32 %v1082, 4
        %v1087 = vadd.s32 %v1082, 5
        %v1088 = vadd.s32 %v1082, 6
        %v1089 = vadd.s32 %v1082, 7
        %v1090 = vadd.s32 %v1082, 8
        %v1091 = vadd.s32 %v1082, 9
        %vm1092 = vcmp.ge.s32.totalorder %v1082, 0
        %vm1093 = vcmp.ge.s32.totalorder %v1083, 0
        %vm1094 = vcmp.ge.s32.totalorder %v1084, 0
        %vm1095 = vcmp.ge.s32.totalorder %v1085, 0
        %vm1096 = vcmp.ge.s32.totalorder %v1086, 0
        %vm1097 = vcmp.ge.s32.totalorder %v1087, 0
        %vm1098 = vcmp.ge.s32.totalorder %v1088, 0
        %vm1099 = vcmp.ge.s32.totalorder %v1089, 0
        %vm1100 = vcmp.ge.s32.totalorder %v1090, 0
        %vm1101 = vcmp.ge.s32.totalorder %v1091, 0
        %vm1102 = vcmp.lt.s32.totalorder %v1082, 16
        %vm1103 = vcmp.lt.s32.totalorder %v1083, 16
        %vm1104 = vcmp.lt.s32.totalorder %v1084, 16
        %vm1105 = vcmp.lt.s32.totalorder %v1085, 16
        %vm1106 = vcmp.lt.s32.totalorder %v1086, 16
        %vm1107 = vcmp.lt.s32.totalorder %v1087, 16
        %vm1108 = vcmp.lt.s32.totalorder %v1088, 16
        %vm1109 = vcmp.lt.s32.totalorder %v1089, 16
        %vm1110 = vcmp.lt.s32.totalorder %v1090, 16
        %vm1111 = vcmp.lt.s32.totalorder %v1091, 16
        %vm1112 = vmand %vm1092, %vm1102
        %vm1113 = vmand %vm1093, %vm1103
        %vm1114 = vmand %vm1094, %vm1104
        %vm1115 = vmand %vm1095, %vm1105
        %vm1116 = vmand %vm1096, %vm1106
        %vm1117 = vmand %vm1097, %vm1107
        %vm1118 = vmand %vm1098, %vm1108
        %vm1119 = vmand %vm1099, %vm1109
        %vm1120 = vmand %vm1100, %vm1110
        %vm1121 = vmand %vm1101, %vm1111
        %v1122 = vsel %vm1112, 1, 0
        %v1123 = vsel %vm1113, 1, 0
        %v1124 = vsel %vm1114, 1, 0
        %v1125 = vsel %vm1115, 1, 0
        %v1126 = vsel %vm1116, 1, 0
        %v1127 = vsel %vm1117, 1, 0
        %v1128 = vsel %vm1118, 1, 0
        %v1129 = vsel %vm1119, 1, 0
        %v1130 = vsel %vm1120, 1, 0
        %v1131 = vsel %vm1121, 1, 0
        %vm1132 = vcmp.eq.s32.totalorder %v1122, 1
        %vm1133 = vcmp.eq.s32.totalorder %v1123, 1
        %vm1134 = vcmp.eq.s32.totalorder %v1124, 1
        %vm1135 = vcmp.eq.s32.totalorder %v1125, 1
        %vm1136 = vcmp.eq.s32.totalorder %v1126, 1
        %vm1137 = vcmp.eq.s32.totalorder %v1127, 1
        %vm1138 = vcmp.eq.s32.totalorder %v1128, 1
        %vm1139 = vcmp.eq.s32.totalorder %v1129, 1
        %vm1140 = vcmp.eq.s32.totalorder %v1130, 1
        %vm1141 = vcmp.eq.s32.totalorder %v1131, 1
        %v1142 = vsel %vm1132, %v1062, 0.0
        %v1143 = vsel %vm1132, %v1063, 0.0
        %v1144 = vsel %vm1133, %v1064, 0.0
        %v1145 = vsel %vm1133, %v1065, 0.0
        %v1146 = vsel %vm1134, %v1066, 0.0
        %v1147 = vsel %vm1134, %v1067, 0.0
        %v1148 = vsel %vm1135, %v1068, 0.0
        %v1149 = vsel %vm1135, %v1069, 0.0
        %v1150 = vsel %vm1136, %v1070, 0.0
        %v1151 = vsel %vm1136, %v1071, 0.0
        %v1152 = vsel %vm1137, %v1072, 0.0
        %v1153 = vsel %vm1137, %v1073, 0.0
        %v1154 = vsel %vm1138, %v1074, 0.0
        %v1155 = vsel %vm1138, %v1075, 0.0
        %v1156 = vsel %vm1139, %v1076, 0.0
        %v1157 = vsel %vm1139, %v1077, 0.0
        %v1158 = vsel %vm1140, %v1078, 0.0
        %v1159 = vsel %vm1140, %v1079, 0.0
        %v1160 = vsel %vm1141, %v1080, 0.0
        %v1161 = vsel %vm1141, %v1081, 0.0
        %vm1162 = vcmask 523264
        %1163 = vst.msk [vmem:[#allocation2] sm:$0xff] %vm1162, 0.0
        %1164 = vst.msk [vmem:[#allocation2 + $0x20] sm:$0xff] %vm1162, 0.0
        %1165 = vst.msk [vmem:[#allocation2 + $0x40] sm:$0xff] %vm1162, 0.0
        %1166 = vst.msk [vmem:[#allocation2 + $0x60] sm:$0xff] %vm1162, 0.0
        %1167 = vst.msk [vmem:[#allocation2 + $0x80] sm:$0xff] %vm1162, 0.0
        %1168 = vst.msk [vmem:[#allocation2 + $0xa0] sm:$0xff] %vm1162, 0.0
        %1169 = vst.msk [vmem:[#allocation2 + $0xc0] sm:$0xff] %vm1162, 0.0
        %1170 = vst.msk [vmem:[#allocation2 + $0xe0] sm:$0xff] %vm1162, 0.0
        %1171 = vst.msk [vmem:[#allocation2 + $0x100] sm:$0xff] %vm1162, 0.0
        %1172 = vst.msk [vmem:[#allocation2 + $0x120] sm:$0xff] %vm1162, 0.0
        %vm1173 = vcmask 516096
        %1174 = vst.msk [vmem:[#allocation2 + $0x18] sm:$0x1] %vm1173, 0.0
        %1175 = vst.msk [vmem:[#allocation2 + $0x38] sm:$0x1] %vm1173, 0.0
        %1176 = vst.msk [vmem:[#allocation2 + $0x58] sm:$0x1] %vm1173, 0.0
        %1177 = vst.msk [vmem:[#allocation2 + $0x78] sm:$0x1] %vm1173, 0.0
        %1178 = vst.msk [vmem:[#allocation2 + $0x98] sm:$0x1] %vm1173, 0.0
        %1179 = vst.msk [vmem:[#allocation2 + $0xb8] sm:$0x1] %vm1173, 0.0
        %1180 = vst.msk [vmem:[#allocation2 + $0xd8] sm:$0x1] %vm1173, 0.0
        %1181 = vst.msk [vmem:[#allocation2 + $0xf8] sm:$0x1] %vm1173, 0.0
        %1182 = vst.msk [vmem:[#allocation2 + $0x118] sm:$0x1] %vm1173, 0.0
        %1183 = vst.msk [vmem:[#allocation2 + $0x138] sm:$0x1] %vm1173, 0.0
        %1184 = vst.msk [vmem:[#allocation2 + $0x8] sm:$0xff] %vm1162, %v1142
        %1185 = vst.msk [vmem:[#allocation2 + $0x10] sm:$0xff] %vm1162, %v1143
        %1186 = vst.msk [vmem:[#allocation2 + $0x28] sm:$0xff] %vm1162, %v1144
        %1187 = vst.msk [vmem:[#allocation2 + $0x30] sm:$0xff] %vm1162, %v1145
        %1188 = vst.msk [vmem:[#allocation2 + $0x48] sm:$0xff] %vm1162, %v1146
        %1189 = vst.msk [vmem:[#allocation2 + $0x50] sm:$0xff] %vm1162, %v1147
        %1190 = vst.msk [vmem:[#allocation2 + $0x68] sm:$0xff] %vm1162, %v1148
        %1191 = vst.msk [vmem:[#allocation2 + $0x70] sm:$0xff] %vm1162, %v1149
        %1192 = vst.msk [vmem:[#allocation2 + $0x88] sm:$0xff] %vm1162, %v1150
        %1193 = vst.msk [vmem:[#allocation2 + $0x90] sm:$0xff] %vm1162, %v1151
        %1194 = vst.msk [vmem:[#allocation2 + $0xa8] sm:$0xff] %vm1162, %v1152
        %1195 = vst.msk [vmem:[#allocation2 + $0xb0] sm:$0xff] %vm1162, %v1153
        %1196 = vst.msk [vmem:[#allocation2 + $0xc8] sm:$0xff] %vm1162, %v1154
        %1197 = vst.msk [vmem:[#allocation2 + $0xd0] sm:$0xff] %vm1162, %v1155
        %1198 = vst.msk [vmem:[#allocation2 + $0xe8] sm:$0xff] %vm1162, %v1156
        %1199 = vst.msk [vmem:[#allocation2 + $0xf0] sm:$0xff] %vm1162, %v1157
        %1200 = vst.msk [vmem:[#allocation2 + $0x108] sm:$0xff] %vm1162, %v1158
        %1201 = vst.msk [vmem:[#allocation2 + $0x110] sm:$0xff] %vm1162, %v1159
        %1202 = vst.msk [vmem:[#allocation2 + $0x128] sm:$0xff] %vm1162, %v1160
        %1203 = vst.msk [vmem:[#allocation2 + $0x130] sm:$0xff] %vm1162, %v1161
        %v1204 = vld [vmem:[#allocation2 + $0x7] sm:$0xff]
        %v1205 = vld [vmem:[#allocation2 + $0xf] sm:$0xff]
        %v1206 = vld [vmem:[#allocation2 + $0x27] sm:$0xff]
        %v1207 = vld [vmem:[#allocation2 + $0x2f] sm:$0xff]
        %v1208 = vld [vmem:[#allocation2 + $0x47] sm:$0xff]
        %v1209 = vld [vmem:[#allocation2 + $0x4f] sm:$0xff]
        %v1210 = vld [vmem:[#allocation2 + $0x67] sm:$0xff]
        %v1211 = vld [vmem:[#allocation2 + $0x6f] sm:$0xff]
        %v1212 = vld [vmem:[#allocation2 + $0x87] sm:$0xff]
        %v1213 = vld [vmem:[#allocation2 + $0x8f] sm:$0xff]
        %v1214 = vld [vmem:[#allocation2 + $0xa7] sm:$0xff]
        %v1215 = vld [vmem:[#allocation2 + $0xaf] sm:$0xff]
        %v1216 = vld [vmem:[#allocation2 + $0xc7] sm:$0xff]
        %v1217 = vld [vmem:[#allocation2 + $0xcf] sm:$0xff]
        %v1218 = vld [vmem:[#allocation2 + $0xe7] sm:$0xff]
        %v1219 = vld [vmem:[#allocation2 + $0xef] sm:$0xff]
        %v1220 = vld [vmem:[%s5] sm:$0x1]
        %v1221 = vperm.slane %v1220, 0
        %v1222 = vmul.f32 %v1204, %v1221
        %v1223 = vmul.f32 %v1205, %v1221
        %v1224 = vmul.f32 %v1206, %v1221
        %v1225 = vmul.f32 %v1207, %v1221
        %v1226 = vmul.f32 %v1208, %v1221
        %v1227 = vmul.f32 %v1209, %v1221
        %v1228 = vmul.f32 %v1210, %v1221
        %v1229 = vmul.f32 %v1211, %v1221
        %v1230 = vmul.f32 %v1212, %v1221
        %v1231 = vmul.f32 %v1213, %v1221
        %v1232 = vmul.f32 %v1214, %v1221
        %v1233 = vmul.f32 %v1215, %v1221
        %v1234 = vmul.f32 %v1216, %v1221
        %v1235 = vmul.f32 %v1217, %v1221
        %v1236 = vmul.f32 %v1218, %v1221
        %v1237 = vmul.f32 %v1219, %v1221
        %v1238 = vld [vmem:[#allocation2 + $0x8] sm:$0xff]
        %v1239 = vld [vmem:[#allocation2 + $0x10] sm:$0xff]
        %v1240 = vld [vmem:[#allocation2 + $0x28] sm:$0xff]
        %v1241 = vld [vmem:[#allocation2 + $0x30] sm:$0xff]
        %v1242 = vld [vmem:[#allocation2 + $0x48] sm:$0xff]
        %v1243 = vld [vmem:[#allocation2 + $0x50] sm:$0xff]
        %v1244 = vld [vmem:[#allocation2 + $0x68] sm:$0xff]
        %v1245 = vld [vmem:[#allocation2 + $0x70] sm:$0xff]
        %v1246 = vld [vmem:[#allocation2 + $0x88] sm:$0xff]
        %v1247 = vld [vmem:[#allocation2 + $0x90] sm:$0xff]
        %v1248 = vld [vmem:[#allocation2 + $0xa8] sm:$0xff]
        %v1249 = vld [vmem:[#allocation2 + $0xb0] sm:$0xff]
        %v1250 = vld [vmem:[#allocation2 + $0xc8] sm:$0xff]
        %v1251 = vld [vmem:[#allocation2 + $0xd0] sm:$0xff]
        %v1252 = vld [vmem:[#allocation2 + $0xe8] sm:$0xff]
        %v1253 = vld [vmem:[#allocation2 + $0xf0] sm:$0xff]
        %v1254 = vld [vmem:[%s5 + $0x1] sm:$0x1]
        %v1255 = vperm.slane %v1254, 0
        %v1256 = vmul.f32 %v1238, %v1255
        %v1257 = vmul.f32 %v1239, %v1255
        %v1258 = vmul.f32 %v1240, %v1255
        %v1259 = vmul.f32 %v1241, %v1255
        %v1260 = vmul.f32 %v1242, %v1255
        %v1261 = vmul.f32 %v1243, %v1255
        %v1262 = vmul.f32 %v1244, %v1255
        %v1263 = vmul.f32 %v1245, %v1255
        %v1264 = vmul.f32 %v1246, %v1255
        %v1265 = vmul.f32 %v1247, %v1255
        %v1266 = vmul.f32 %v1248, %v1255
        %v1267 = vmul.f32 %v1249, %v1255
        %v1268 = vmul.f32 %v1250, %v1255
        %v1269 = vmul.f32 %v1251, %v1255
        %v1270 = vmul.f32 %v1252, %v1255
        %v1271 = vmul.f32 %v1253, %v1255
        %v1272 = vld [vmem:[#allocation2 + $0x9] sm:$0xff]
        %v1273 = vld [vmem:[#allocation2 + $0x11] sm:$0xff]
        %v1274 = vld [vmem:[#allocation2 + $0x29] sm:$0xff]
        %v1275 = vld [vmem:[#allocation2 + $0x31] sm:$0xff]
        %v1276 = vld [vmem:[#allocation2 + $0x49] sm:$0xff]
        %v1277 = vld [vmem:[#allocation2 + $0x51] sm:$0xff]
        %v1278 = vld [vmem:[#allocation2 + $0x69] sm:$0xff]
        %v1279 = vld [vmem:[#allocation2 + $0x71] sm:$0xff]
        %v1280 = vld [vmem:[#allocation2 + $0x89] sm:$0xff]
        %v1281 = vld [vmem:[#allocation2 + $0x91] sm:$0xff]
        %v1282 = vld [vmem:[#allocation2 + $0xa9] sm:$0xff]
        %v1283 = vld [vmem:[#allocation2 + $0xb1] sm:$0xff]
        %v1284 = vld [vmem:[#allocation2 + $0xc9] sm:$0xff]
        %v1285 = vld [vmem:[#allocation2 + $0xd1] sm:$0xff]
        %v1286 = vld [vmem:[#allocation2 + $0xe9] sm:$0xff]
        %v1287 = vld [vmem:[#allocation2 + $0xf1] sm:$0xff]
        %v1288 = vld [vmem:[%s5 + $0x2] sm:$0x1]
        %v1289 = vperm.slane %v1288, 0
        %v1290 = vmul.f32 %v1272, %v1289
        %v1291 = vmul.f32 %v1273, %v1289
        %v1292 = vmul.f32 %v1274, %v1289
        %v1293 = vmul.f32 %v1275, %v1289
        %v1294 = vmul.f32 %v1276, %v1289
        %v1295 = vmul.f32 %v1277, %v1289
        %v1296 = vmul.f32 %v1278, %v1289
        %v1297 = vmul.f32 %v1279, %v1289
        %v1298 = vmul.f32 %v1280, %v1289
        %v1299 = vmul.f32 %v1281, %v1289
        %v1300 = vmul.f32 %v1282, %v1289
        %v1301 = vmul.f32 %v1283, %v1289
        %v1302 = vmul.f32 %v1284, %v1289
        %v1303 = vmul.f32 %v1285, %v1289
        %v1304 = vmul.f32 %v1286, %v1289
        %v1305 = vmul.f32 %v1287, %v1289
        %s1306 = scalar_lea.vmem [#allocation2], 32
        %v1307 = vld [vmem:[%s1306 + $0x7] sm:$0xff]
        %v1308 = vld [vmem:[%s1306 + $0xf] sm:$0xff]
        %v1309 = vld [vmem:[%s1306 + $0x27] sm:$0xff]
        %v1310 = vld [vmem:[%s1306 + $0x2f] sm:$0xff]
        %v1311 = vld [vmem:[%s1306 + $0x47] sm:$0xff]
        %v1312 = vld [vmem:[%s1306 + $0x4f] sm:$0xff]
        %v1313 = vld [vmem:[%s1306 + $0x67] sm:$0xff]
        %v1314 = vld [vmem:[%s1306 + $0x6f] sm:$0xff]
        %v1315 = vld [vmem:[%s1306 + $0x87] sm:$0xff]
        %v1316 = vld [vmem:[%s1306 + $0x8f] sm:$0xff]
        %v1317 = vld [vmem:[%s1306 + $0xa7] sm:$0xff]
        %v1318 = vld [vmem:[%s1306 + $0xaf] sm:$0xff]
        %v1319 = vld [vmem:[%s1306 + $0xc7] sm:$0xff]
        %v1320 = vld [vmem:[%s1306 + $0xcf] sm:$0xff]
        %v1321 = vld [vmem:[%s1306 + $0xe7] sm:$0xff]
        %v1322 = vld [vmem:[%s1306 + $0xef] sm:$0xff]
        %v1323 = vld [vmem:[%s5 + $0x3] sm:$0x1]
        %v1324 = vperm.slane %v1323, 0
        %v1325 = vmul.f32 %v1307, %v1324
        %v1326 = vmul.f32 %v1308, %v1324
        %v1327 = vmul.f32 %v1309, %v1324
        %v1328 = vmul.f32 %v1310, %v1324
        %v1329 = vmul.f32 %v1311, %v1324
        %v1330 = vmul.f32 %v1312, %v1324
        %v1331 = vmul.f32 %v1313, %v1324
        %v1332 = vmul.f32 %v1314, %v1324
        %v1333 = vmul.f32 %v1315, %v1324
        %v1334 = vmul.f32 %v1316, %v1324
        %v1335 = vmul.f32 %v1317, %v1324
        %v1336 = vmul.f32 %v1318, %v1324
        %v1337 = vmul.f32 %v1319, %v1324
        %v1338 = vmul.f32 %v1320, %v1324
        %v1339 = vmul.f32 %v1321, %v1324
        %v1340 = vmul.f32 %v1322, %v1324
        %v1341 = vld [vmem:[%s1306 + $0x8] sm:$0xff]
        %v1342 = vld [vmem:[%s1306 + $0x10] sm:$0xff]
        %v1343 = vld [vmem:[%s1306 + $0x28] sm:$0xff]
        %v1344 = vld [vmem:[%s1306 + $0x30] sm:$0xff]
        %v1345 = vld [vmem:[%s1306 + $0x48] sm:$0xff]
        %v1346 = vld [vmem:[%s1306 + $0x50] sm:$0xff]
        %v1347 = vld [vmem:[%s1306 + $0x68] sm:$0xff]
        %v1348 = vld [vmem:[%s1306 + $0x70] sm:$0xff]
        %v1349 = vld [vmem:[%s1306 + $0x88] sm:$0xff]
        %v1350 = vld [vmem:[%s1306 + $0x90] sm:$0xff]
        %v1351 = vld [vmem:[%s1306 + $0xa8] sm:$0xff]
        %v1352 = vld [vmem:[%s1306 + $0xb0] sm:$0xff]
        %v1353 = vld [vmem:[%s1306 + $0xc8] sm:$0xff]
        %v1354 = vld [vmem:[%s1306 + $0xd0] sm:$0xff]
        %v1355 = vld [vmem:[%s1306 + $0xe8] sm:$0xff]
        %v1356 = vld [vmem:[%s1306 + $0xf0] sm:$0xff]
        %v1357 = vld [vmem:[%s5 + $0x4] sm:$0x1]
        %v1358 = vperm.slane %v1357, 0
        %v1359 = vmul.f32 %v1341, %v1358
        %v1360 = vmul.f32 %v1342, %v1358
        %v1361 = vmul.f32 %v1343, %v1358
        %v1362 = vmul.f32 %v1344, %v1358
        %v1363 = vmul.f32 %v1345, %v1358
        %v1364 = vmul.f32 %v1346, %v1358
        %v1365 = vmul.f32 %v1347, %v1358
        %v1366 = vmul.f32 %v1348, %v1358
        %v1367 = vmul.f32 %v1349, %v1358
        %v1368 = vmul.f32 %v1350, %v1358
        %v1369 = vmul.f32 %v1351, %v1358
        %v1370 = vmul.f32 %v1352, %v1358
        %v1371 = vmul.f32 %v1353, %v1358
        %v1372 = vmul.f32 %v1354, %v1358
        %v1373 = vmul.f32 %v1355, %v1358
        %v1374 = vmul.f32 %v1356, %v1358
        %v1375 = vld [vmem:[%s1306 + $0x9] sm:$0xff]
        %v1376 = vld [vmem:[%s1306 + $0x11] sm:$0xff]
        %v1377 = vld [vmem:[%s1306 + $0x29] sm:$0xff]
        %v1378 = vld [vmem:[%s1306 + $0x31] sm:$0xff]
        %v1379 = vld [vmem:[%s1306 + $0x49] sm:$0xff]
        %v1380 = vld [vmem:[%s1306 + $0x51] sm:$0xff]
        %v1381 = vld [vmem:[%s1306 + $0x69] sm:$0xff]
        %v1382 = vld [vmem:[%s1306 + $0x71] sm:$0xff]
        %v1383 = vld [vmem:[%s1306 + $0x89] sm:$0xff]
        %v1384 = vld [vmem:[%s1306 + $0x91] sm:$0xff]
        %v1385 = vld [vmem:[%s1306 + $0xa9] sm:$0xff]
        %v1386 = vld [vmem:[%s1306 + $0xb1] sm:$0xff]
        %v1387 = vld [vmem:[%s1306 + $0xc9] sm:$0xff]
        %v1388 = vld [vmem:[%s1306 + $0xd1] sm:$0xff]
        %v1389 = vld [vmem:[%s1306 + $0xe9] sm:$0xff]
        %v1390 = vld [vmem:[%s1306 + $0xf1] sm:$0xff]
        %v1391 = vld [vmem:[%s5 + $0x5] sm:$0x1]
        %v1392 = vperm.slane %v1391, 0
        %v1393 = vmul.f32 %v1375, %v1392
        %v1394 = vmul.f32 %v1376, %v1392
        %v1395 = vmul.f32 %v1377, %v1392
        %v1396 = vmul.f32 %v1378, %v1392
        %v1397 = vmul.f32 %v1379, %v1392
        %v1398 = vmul.f32 %v1380, %v1392
        %v1399 = vmul.f32 %v1381, %v1392
        %v1400 = vmul.f32 %v1382, %v1392
        %v1401 = vmul.f32 %v1383, %v1392
        %v1402 = vmul.f32 %v1384, %v1392
        %v1403 = vmul.f32 %v1385, %v1392
        %v1404 = vmul.f32 %v1386, %v1392
        %v1405 = vmul.f32 %v1387, %v1392
        %v1406 = vmul.f32 %v1388, %v1392
        %v1407 = vmul.f32 %v1389, %v1392
        %v1408 = vmul.f32 %v1390, %v1392
        %s1409 = scalar_lea.vmem [#allocation2], 64
        %v1410 = vld [vmem:[%s1409 + $0x7] sm:$0xff]
        %v1411 = vld [vmem:[%s1409 + $0xf] sm:$0xff]
        %v1412 = vld [vmem:[%s1409 + $0x27] sm:$0xff]
        %v1413 = vld [vmem:[%s1409 + $0x2f] sm:$0xff]
        %v1414 = vld [vmem:[%s1409 + $0x47] sm:$0xff]
        %v1415 = vld [vmem:[%s1409 + $0x4f] sm:$0xff]
        %v1416 = vld [vmem:[%s1409 + $0x67] sm:$0xff]
        %v1417 = vld [vmem:[%s1409 + $0x6f] sm:$0xff]
        %v1418 = vld [vmem:[%s1409 + $0x87] sm:$0xff]
        %v1419 = vld [vmem:[%s1409 + $0x8f] sm:$0xff]
        %v1420 = vld [vmem:[%s1409 + $0xa7] sm:$0xff]
        %v1421 = vld [vmem:[%s1409 + $0xaf] sm:$0xff]
        %v1422 = vld [vmem:[%s1409 + $0xc7] sm:$0xff]
        %v1423 = vld [vmem:[%s1409 + $0xcf] sm:$0xff]
        %v1424 = vld [vmem:[%s1409 + $0xe7] sm:$0xff]
        %v1425 = vld [vmem:[%s1409 + $0xef] sm:$0xff]
        %v1426 = vld [vmem:[%s5 + $0x6] sm:$0x1]
        %v1427 = vperm.slane %v1426, 0
        %v1428 = vmul.f32 %v1410, %v1427
        %v1429 = vmul.f32 %v1411, %v1427
        %v1430 = vmul.f32 %v1412, %v1427
        %v1431 = vmul.f32 %v1413, %v1427
        %v1432 = vmul.f32 %v1414, %v1427
        %v1433 = vmul.f32 %v1415, %v1427
        %v1434 = vmul.f32 %v1416, %v1427
        %v1435 = vmul.f32 %v1417, %v1427
        %v1436 = vmul.f32 %v1418, %v1427
        %v1437 = vmul.f32 %v1419, %v1427
        %v1438 = vmul.f32 %v1420, %v1427
        %v1439 = vmul.f32 %v1421, %v1427
        %v1440 = vmul.f32 %v1422, %v1427
        %v1441 = vmul.f32 %v1423, %v1427
        %v1442 = vmul.f32 %v1424, %v1427
        %v1443 = vmul.f32 %v1425, %v1427
        %v1444 = vld [vmem:[%s1409 + $0x8] sm:$0xff]
        %v1445 = vld [vmem:[%s1409 + $0x10] sm:$0xff]
        %v1446 = vld [vmem:[%s1409 + $0x28] sm:$0xff]
        %v1447 = vld [vmem:[%s1409 + $0x30] sm:$0xff]
        %v1448 = vld [vmem:[%s1409 + $0x48] sm:$0xff]
        %v1449 = vld [vmem:[%s1409 + $0x50] sm:$0xff]
        %v1450 = vld [vmem:[%s1409 + $0x68] sm:$0xff]
        %v1451 = vld [vmem:[%s1409 + $0x70] sm:$0xff]
        %v1452 = vld [vmem:[%s1409 + $0x88] sm:$0xff]
        %v1453 = vld [vmem:[%s1409 + $0x90] sm:$0xff]
        %v1454 = vld [vmem:[%s1409 + $0xa8] sm:$0xff]
        %v1455 = vld [vmem:[%s1409 + $0xb0] sm:$0xff]
        %v1456 = vld [vmem:[%s1409 + $0xc8] sm:$0xff]
        %v1457 = vld [vmem:[%s1409 + $0xd0] sm:$0xff]
        %v1458 = vld [vmem:[%s1409 + $0xe8] sm:$0xff]
        %v1459 = vld [vmem:[%s1409 + $0xf0] sm:$0xff]
        %v1460 = vld [vmem:[%s5 + $0x7] sm:$0x1]
        %v1461 = vperm.slane %v1460, 0
        %v1462 = vmul.f32 %v1444, %v1461
        %v1463 = vmul.f32 %v1445, %v1461
        %v1464 = vmul.f32 %v1446, %v1461
        %v1465 = vmul.f32 %v1447, %v1461
        %v1466 = vmul.f32 %v1448, %v1461
        %v1467 = vmul.f32 %v1449, %v1461
        %v1468 = vmul.f32 %v1450, %v1461
        %v1469 = vmul.f32 %v1451, %v1461
        %v1470 = vmul.f32 %v1452, %v1461
        %v1471 = vmul.f32 %v1453, %v1461
        %v1472 = vmul.f32 %v1454, %v1461
        %v1473 = vmul.f32 %v1455, %v1461
        %v1474 = vmul.f32 %v1456, %v1461
        %v1475 = vmul.f32 %v1457, %v1461
        %v1476 = vmul.f32 %v1458, %v1461
        %v1477 = vmul.f32 %v1459, %v1461
        %v1478 = vld [vmem:[%s1409 + $0x9] sm:$0xff]
        %v1479 = vld [vmem:[%s1409 + $0x11] sm:$0xff]
        %v1480 = vld [vmem:[%s1409 + $0x29] sm:$0xff]
        %v1481 = vld [vmem:[%s1409 + $0x31] sm:$0xff]
        %v1482 = vld [vmem:[%s1409 + $0x49] sm:$0xff]
        %v1483 = vld [vmem:[%s1409 + $0x51] sm:$0xff]
        %v1484 = vld [vmem:[%s1409 + $0x69] sm:$0xff]
        %v1485 = vld [vmem:[%s1409 + $0x71] sm:$0xff]
        %v1486 = vld [vmem:[%s1409 + $0x89] sm:$0xff]
        %v1487 = vld [vmem:[%s1409 + $0x91] sm:$0xff]
        %v1488 = vld [vmem:[%s1409 + $0xa9] sm:$0xff]
        %v1489 = vld [vmem:[%s1409 + $0xb1] sm:$0xff]
        %v1490 = vld [vmem:[%s1409 + $0xc9] sm:$0xff]
        %v1491 = vld [vmem:[%s1409 + $0xd1] sm:$0xff]
        %v1492 = vld [vmem:[%s1409 + $0xe9] sm:$0xff]
        %v1493 = vld [vmem:[%s1409 + $0xf1] sm:$0xff]
        %v1494 = vld [vmem:[%s5 + $0x8] sm:$0x1]
        %v1495 = vperm.slane %v1494, 0
        %v1496 = vmul.f32 %v1478, %v1495
        %v1497 = vmul.f32 %v1479, %v1495
        %v1498 = vmul.f32 %v1480, %v1495
        %v1499 = vmul.f32 %v1481, %v1495
        %v1500 = vmul.f32 %v1482, %v1495
        %v1501 = vmul.f32 %v1483, %v1495
        %v1502 = vmul.f32 %v1484, %v1495
        %v1503 = vmul.f32 %v1485, %v1495
        %v1504 = vmul.f32 %v1486, %v1495
        %v1505 = vmul.f32 %v1487, %v1495
        %v1506 = vmul.f32 %v1488, %v1495
        %v1507 = vmul.f32 %v1489, %v1495
        %v1508 = vmul.f32 %v1490, %v1495
        %v1509 = vmul.f32 %v1491, %v1495
        %v1510 = vmul.f32 %v1492, %v1495
        %v1511 = vmul.f32 %v1493, %v1495
        %v1512 = vadd.f32 %v1222, %v1256
        %v1513 = vadd.f32 %v1223, %v1257
        %v1514 = vadd.f32 %v1224, %v1258
        %v1515 = vadd.f32 %v1225, %v1259
        %v1516 = vadd.f32 %v1226, %v1260
        %v1517 = vadd.f32 %v1227, %v1261
        %v1518 = vadd.f32 %v1228, %v1262
        %v1519 = vadd.f32 %v1229, %v1263
        %v1520 = vadd.f32 %v1230, %v1264
        %v1521 = vadd.f32 %v1231, %v1265
        %v1522 = vadd.f32 %v1232, %v1266
        %v1523 = vadd.f32 %v1233, %v1267
        %v1524 = vadd.f32 %v1234, %v1268
        %v1525 = vadd.f32 %v1235, %v1269
        %v1526 = vadd.f32 %v1236, %v1270
        %v1527 = vadd.f32 %v1237, %v1271
        %v1528 = vadd.f32 %v1290, %v1325
        %v1529 = vadd.f32 %v1291, %v1326
        %v1530 = vadd.f32 %v1292, %v1327
        %v1531 = vadd.f32 %v1293, %v1328
        %v1532 = vadd.f32 %v1294, %v1329
        %v1533 = vadd.f32 %v1295, %v1330
        %v1534 = vadd.f32 %v1296, %v1331
        %v1535 = vadd.f32 %v1297, %v1332
        %v1536 = vadd.f32 %v1298, %v1333
        %v1537 = vadd.f32 %v1299, %v1334
        %v1538 = vadd.f32 %v1300, %v1335
        %v1539 = vadd.f32 %v1301, %v1336
        %v1540 = vadd.f32 %v1302, %v1337
        %v1541 = vadd.f32 %v1303, %v1338
        %v1542 = vadd.f32 %v1304, %v1339
        %v1543 = vadd.f32 %v1305, %v1340
        %v1544 = vadd.f32 %v1359, %v1393
        %v1545 = vadd.f32 %v1360, %v1394
        %v1546 = vadd.f32 %v1361, %v1395
        %v1547 = vadd.f32 %v1362, %v1396
        %v1548 = vadd.f32 %v1363, %v1397
        %v1549 = vadd.f32 %v1364, %v1398
        %v1550 = vadd.f32 %v1365, %v1399
        %v1551 = vadd.f32 %v1366, %v1400
        %v1552 = vadd.f32 %v1367, %v1401
        %v1553 = vadd.f32 %v1368, %v1402
        %v1554 = vadd.f32 %v1369, %v1403
        %v1555 = vadd.f32 %v1370, %v1404
        %v1556 = vadd.f32 %v1371, %v1405
        %v1557 = vadd.f32 %v1372, %v1406
        %v1558 = vadd.f32 %v1373, %v1407
        %v1559 = vadd.f32 %v1374, %v1408
        %v1560 = vadd.f32 %v1428, %v1462
        %v1561 = vadd.f32 %v1429, %v1463
        %v1562 = vadd.f32 %v1430, %v1464
        %v1563 = vadd.f32 %v1431, %v1465
        %v1564 = vadd.f32 %v1432, %v1466
        %v1565 = vadd.f32 %v1433, %v1467
        %v1566 = vadd.f32 %v1434, %v1468
        %v1567 = vadd.f32 %v1435, %v1469
        %v1568 = vadd.f32 %v1436, %v1470
        %v1569 = vadd.f32 %v1437, %v1471
        %v1570 = vadd.f32 %v1438, %v1472
        %v1571 = vadd.f32 %v1439, %v1473
        %v1572 = vadd.f32 %v1440, %v1474
        %v1573 = vadd.f32 %v1441, %v1475
        %v1574 = vadd.f32 %v1442, %v1476
        %v1575 = vadd.f32 %v1443, %v1477
        %v1576 = vadd.f32 %v1512, %v1528
        %v1577 = vadd.f32 %v1513, %v1529
        %v1578 = vadd.f32 %v1514, %v1530
        %v1579 = vadd.f32 %v1515, %v1531
        %v1580 = vadd.f32 %v1516, %v1532
        %v1581 = vadd.f32 %v1517, %v1533
        %v1582 = vadd.f32 %v1518, %v1534
        %v1583 = vadd.f32 %v1519, %v1535
        %v1584 = vadd.f32 %v1520, %v1536
        %v1585 = vadd.f32 %v1521, %v1537
        %v1586 = vadd.f32 %v1522, %v1538
        %v1587 = vadd.f32 %v1523, %v1539
        %v1588 = vadd.f32 %v1524, %v1540
        %v1589 = vadd.f32 %v1525, %v1541
        %v1590 = vadd.f32 %v1526, %v1542
        %v1591 = vadd.f32 %v1527, %v1543
        %v1592 = vadd.f32 %v1544, %v1560
        %v1593 = vadd.f32 %v1545, %v1561
        %v1594 = vadd.f32 %v1546, %v1562
        %v1595 = vadd.f32 %v1547, %v1563
        %v1596 = vadd.f32 %v1548, %v1564
        %v1597 = vadd.f32 %v1549, %v1565
        %v1598 = vadd.f32 %v1550, %v1566
        %v1599 = vadd.f32 %v1551, %v1567
        %v1600 = vadd.f32 %v1552, %v1568
        %v1601 = vadd.f32 %v1553, %v1569
        %v1602 = vadd.f32 %v1554, %v1570
        %v1603 = vadd.f32 %v1555, %v1571
        %v1604 = vadd.f32 %v1556, %v1572
        %v1605 = vadd.f32 %v1557, %v1573
        %v1606 = vadd.f32 %v1558, %v1574
        %v1607 = vadd.f32 %v1559, %v1575
        %v1608 = vadd.f32 %v1576, %v1592
        %v1609 = vadd.f32 %v1577, %v1593
        %v1610 = vadd.f32 %v1578, %v1594
        %v1611 = vadd.f32 %v1579, %v1595
        %v1612 = vadd.f32 %v1580, %v1596
        %v1613 = vadd.f32 %v1581, %v1597
        %v1614 = vadd.f32 %v1582, %v1598
        %v1615 = vadd.f32 %v1583, %v1599
        %v1616 = vadd.f32 %v1584, %v1600
        %v1617 = vadd.f32 %v1585, %v1601
        %v1618 = vadd.f32 %v1586, %v1602
        %v1619 = vadd.f32 %v1587, %v1603
        %v1620 = vadd.f32 %v1588, %v1604
        %v1621 = vadd.f32 %v1589, %v1605
        %v1622 = vadd.f32 %v1590, %v1606
        %v1623 = vadd.f32 %v1591, %v1607
        %v1624 = vadd.f32 %v1608, %v1496
        %v1625 = vadd.f32 %v1609, %v1497
        %v1626 = vadd.f32 %v1610, %v1498
        %v1627 = vadd.f32 %v1611, %v1499
        %v1628 = vadd.f32 %v1612, %v1500
        %v1629 = vadd.f32 %v1613, %v1501
        %v1630 = vadd.f32 %v1614, %v1502
        %v1631 = vadd.f32 %v1615, %v1503
        %v1632 = vadd.f32 %v1616, %v1504
        %v1633 = vadd.f32 %v1617, %v1505
        %v1634 = vadd.f32 %v1618, %v1506
        %v1635 = vadd.f32 %v1619, %v1507
        %v1636 = vadd.f32 %v1620, %v1508
        %v1637 = vadd.f32 %v1621, %v1509
        %v1638 = vadd.f32 %v1622, %v1510
        %v1639 = vadd.f32 %v1623, %v1511
        %v1640 = vld [vmem:[%s6] sm:$0x1]
        %v1642 = vperm.slane %v1640, 0
        %v1644 = vadd.f32 %v1624, %v1642
        %v1645 = vadd.f32 %v1625, %v1642
        %v1646 = vadd.f32 %v1626, %v1642
        %v1647 = vadd.f32 %v1627, %v1642
        %v1648 = vadd.f32 %v1628, %v1642
        %v1649 = vadd.f32 %v1629, %v1642
        %v1650 = vadd.f32 %v1630, %v1642
        %v1651 = vadd.f32 %v1631, %v1642
        %v1652 = vadd.f32 %v1632, %v1642
        %v1653 = vadd.f32 %v1633, %v1642
        %v1654 = vadd.f32 %v1634, %v1642
        %v1655 = vadd.f32 %v1635, %v1642
        %v1656 = vadd.f32 %v1636, %v1642
        %v1657 = vadd.f32 %v1637, %v1642
        %v1658 = vadd.f32 %v1638, %v1642
        %v1659 = vadd.f32 %v1639, %v1642
        %v1660 = vmax.f32 %v1644, 0.0
        %v1661 = vmax.f32 %v1645, 0.0
        %v1662 = vmax.f32 %v1646, 0.0
        %v1663 = vmax.f32 %v1647, 0.0
        %v1664 = vmax.f32 %v1648, 0.0
        %v1665 = vmax.f32 %v1649, 0.0
        %v1666 = vmax.f32 %v1650, 0.0
        %v1667 = vmax.f32 %v1651, 0.0
        %v1668 = vmax.f32 %v1652, 0.0
        %v1669 = vmax.f32 %v1653, 0.0
        %v1670 = vmax.f32 %v1654, 0.0
        %v1671 = vmax.f32 %v1655, 0.0
        %v1672 = vmax.f32 %v1656, 0.0
        %v1673 = vmax.f32 %v1657, 0.0
        %v1674 = vmax.f32 %v1658, 0.0
        %v1675 = vmax.f32 %v1659, 0.0
        %v1676 = vld [vmem:[%s7] sm:$0xff]
        %v1677 = vld [vmem:[%s7 + $0x8] sm:$0xff]
        %v1678 = vld [vmem:[%s7 + $0x10] sm:$0xff]
        %v1679 = vld [vmem:[%s7 + $0x18] sm:$0xff]
        %v1680 = vld [vmem:[%s7 + $0x20] sm:$0xff]
        %v1681 = vld [vmem:[%s7 + $0x28] sm:$0xff]
        %v1682 = vld [vmem:[%s7 + $0x30] sm:$0xff]
        %v1683 = vld [vmem:[%s7 + $0x38] sm:$0xff]
        %v1684 = vld [vmem:[%s8] sm:$0x1]
        %v1686 = vperm.slane %v1684, 0
        %v1689 = vsel %vm1162, %v1660, 0
        %v1692 = vsel %vm1162, %v1661, 0
        %v1695 = vsel %vm1162, %v1662, 0
        %v1698 = vsel %vm1162, %v1663, 0
        %v1701 = vsel %vm1162, %v1664, 0
        %v1704 = vsel %vm1162, %v1665, 0
        %v1707 = vsel %vm1162, %v1666, 0
        %v1710 = vsel %vm1162, %v1667, 0
        %v1713 = vsel %vm1162, %v1668, 0
        %v1716 = vsel %vm1162, %v1669, 0
        %v1719 = vsel %vm1162, %v1670, 0
        %v1722 = vsel %vm1162, %v1671, 0
        %v1725 = vsel %vm1162, %v1672, 0
        %v1728 = vsel %vm1162, %v1673, 0
        %v1731 = vsel %vm1162, %v1674, 0
        %v1734 = vsel %vm1162, %v1675, 0
        %1736 = vmatpush.msra.mxu0 0.0
        %1737 = vmatpush.msra.mxu0 0.0
        %1738 = vmatpush.msra.mxu0 0.0
        %1739 = vmatpush.msra.mxu0 0.0
        %1740 = vmatpush.msra.mxu0 0.0
        %1741 = vmatpush.msra.mxu0 0.0
        %1742 = vmatpush.msra.mxu0 0.0
        %1743 = vmatpush.msra.mxu0 0.0
        %1744 = vmatpush.msra.mxu0 %v1683
        %1745 = vmatpush.msra.mxu0 %v1682
        %1746 = vmatpush.msra.mxu0 %v1681
        %1747 = vmatpush.msra.mxu0 %v1680
        %1748 = vmatpush.msra.mxu0 %v1679
        %1749 = vmatpush.msra.mxu0 %v1678
        %1750 = vmatpush.msra.mxu0 %v1677
        %1751 = vmatpush.msra.mxu0 %v1676
        %1752 = vmatmul.f32.gmra.mxu0 %v1689
        %v1753 = vpop.f32.mrf.mxu0
        %v1754 = vadd.f32 %v1686, %v1753
        %1755 = vmatmul.f32.gmra.mxu0 %v1692
        %v1756 = vpop.f32.mrf.mxu0
        %v1757 = vadd.f32 %v1686, %v1756
        %1758 = vmatmul.f32.gmra.mxu0 %v1695
        %v1759 = vpop.f32.mrf.mxu0
        %v1760 = vadd.f32 %v1686, %v1759
        %1761 = vmatmul.f32.gmra.mxu0 %v1698
        %v1762 = vpop.f32.mrf.mxu0
        %v1763 = vadd.f32 %v1686, %v1762
        %1764 = vmatmul.f32.gmra.mxu0 %v1701
        %v1765 = vpop.f32.mrf.mxu0
        %v1766 = vadd.f32 %v1686, %v1765
        %1767 = vmatmul.f32.gmra.mxu0 %v1704
        %v1768 = vpop.f32.mrf.mxu0
        %v1769 = vadd.f32 %v1686, %v1768
        %1770 = vmatmul.f32.gmra.mxu0 %v1707
        %v1771 = vpop.f32.mrf.mxu0
        %v1772 = vadd.f32 %v1686, %v1771
        %1773 = vmatmul.f32.gmra.mxu0 %v1710
        %v1774 = vpop.f32.mrf.mxu0
        %v1775 = vadd.f32 %v1686, %v1774
        %1776 = vmatmul.f32.gmra.mxu0 %v1713
        %v1777 = vpop.f32.mrf.mxu0
        %v1778 = vadd.f32 %v1686, %v1777
        %1779 = vmatmul.f32.gmra.mxu0 %v1716
        %v1780 = vpop.f32.mrf.mxu0
        %v1781 = vadd.f32 %v1686, %v1780
        %1782 = vmatmul.f32.gmra.mxu0 %v1719
        %v1783 = vpop.f32.mrf.mxu0
        %v1784 = vadd.f32 %v1686, %v1783
        %1785 = vmatmul.f32.gmra.mxu0 %v1722
        %v1786 = vpop.f32.mrf.mxu0
        %v1787 = vadd.f32 %v1686, %v1786
        %1788 = vmatmul.f32.gmra.mxu0 %v1725
        %v1789 = vpop.f32.mrf.mxu0
        %v1790 = vadd.f32 %v1686, %v1789
        %1791 = vmatmul.f32.gmra.mxu0 %v1728
        %v1792 = vpop.f32.mrf.mxu0
        %v1793 = vadd.f32 %v1686, %v1792
        %1794 = vmatmul.f32.gmra.mxu0 %v1731
        %v1795 = vpop.f32.mrf.mxu0
        %v1796 = vadd.f32 %v1686, %v1795
        %1797 = vmatmul.f32.gmra.mxu0 %v1734
        %v1798 = vpop.f32.mrf.mxu0
        %v1799 = vadd.f32 %v1686, %v1798
        %1800 = vdwg.mxu0
        %v1801 = vld [vmem:[%s607 + $0x1] sm:$0xff]
        %v1802 = vld [vmem:[%s607 + $0x9] sm:$0xff]
        %v1803 = vld [vmem:[%s607 + $0x19] sm:$0xff]
        %v1804 = vld [vmem:[%s607 + $0x21] sm:$0xff]
        %v1805 = vld [vmem:[%s607 + $0x31] sm:$0xff]
        %v1806 = vld [vmem:[%s607 + $0x39] sm:$0xff]
        %v1807 = vld [vmem:[%s607 + $0x49] sm:$0xff]
        %v1808 = vld [vmem:[%s607 + $0x51] sm:$0xff]
        %v1809 = vld [vmem:[%s607 + $0x61] sm:$0xff]
        %v1810 = vld [vmem:[%s607 + $0x69] sm:$0xff]
        %v1811 = vld [vmem:[%s607 + $0x79] sm:$0xff]
        %v1812 = vld [vmem:[%s607 + $0x81] sm:$0xff]
        %v1813 = vld [vmem:[%s607 + $0x91] sm:$0xff]
        %v1814 = vld [vmem:[%s607 + $0x99] sm:$0xff]
        %v1815 = vld [vmem:[%s607 + $0xa9] sm:$0xff]
        %v1816 = vld [vmem:[%s607 + $0xb1] sm:$0xff]
        %v1817 = vadd.f32 %v1754, %v1801
        %v1818 = vadd.f32 %v1757, %v1802
        %v1819 = vadd.f32 %v1760, %v1803
        %v1820 = vadd.f32 %v1763, %v1804
        %v1821 = vadd.f32 %v1766, %v1805
        %v1822 = vadd.f32 %v1769, %v1806
        %v1823 = vadd.f32 %v1772, %v1807
        %v1824 = vadd.f32 %v1775, %v1808
        %v1825 = vadd.f32 %v1778, %v1809
        %v1826 = vadd.f32 %v1781, %v1810
        %v1827 = vadd.f32 %v1784, %v1811
        %v1828 = vadd.f32 %v1787, %v1812
        %v1829 = vadd.f32 %v1790, %v1813
        %v1830 = vadd.f32 %v1793, %v1814
        %v1831 = vadd.f32 %v1796, %v1815
        %v1832 = vadd.f32 %v1799, %v1816
        %1833 = vst.msk [vmem:[%s339] sm:$0xff] %vm924, %v1817
        %1834 = vst.msk [vmem:[%s339 + $0x8] sm:$0xff] %vm924, %v1818
        %1835 = vst.msk [vmem:[%s339 + $0x10] sm:$0xff] %vm924, %v1819
        %1836 = vst.msk [vmem:[%s339 + $0x18] sm:$0xff] %vm924, %v1820
        %1837 = vst.msk [vmem:[%s339 + $0x20] sm:$0xff] %vm924, %v1821
        %1838 = vst.msk [vmem:[%s339 + $0x28] sm:$0xff] %vm924, %v1822
        %1839 = vst.msk [vmem:[%s339 + $0x30] sm:$0xff] %vm924, %v1823
        %1840 = vst.msk [vmem:[%s339 + $0x38] sm:$0xff] %vm924, %v1824
        %1841 = vst.msk [vmem:[%s339 + $0x40] sm:$0xff] %vm924, %v1825
        %1842 = vst.msk [vmem:[%s339 + $0x48] sm:$0xff] %vm924, %v1826
        %1843 = vst.msk [vmem:[%s339 + $0x50] sm:$0xff] %vm924, %v1827
        %1844 = vst.msk [vmem:[%s339 + $0x58] sm:$0xff] %vm924, %v1828
        %1845 = vst.msk [vmem:[%s339 + $0x60] sm:$0xff] %vm924, %v1829
        %1846 = vst.msk [vmem:[%s339 + $0x68] sm:$0xff] %vm924, %v1830
        %1847 = vst.msk [vmem:[%s339 + $0x70] sm:$0xff] %vm924, %v1831
        %1848 = vst.msk [vmem:[%s339 + $0x78] sm:$0xff] %vm924, %v1832
        %s1849 = sand.u32 %s239, 1
        %s1850 = scalar_lea.sflag [#allocation4], %s1849
        %s1851 = sand.u32 %s239, 1
        %s1852 = smul.addr %s1851, 128
        %s1853 = scalar_lea.vmem [#allocation3], %s1852
        // Predicated region
        $region57: #{tpu_custom_call.1} parent=55 // pred_check
          %p1854 = pneg %p249
        $region58: #{tpu_custom_call.1} parent=55 // pred_check_branch
          %1856 = sbr.rel (%p1854) target = $region60
        $region59: #{tpu_custom_call.1} parent=55 // pred_region
          %s1857 = smul.u32 8, %s28
          %1859 = vsyncadd %s1850, 0
          %s1860 = smul.addr %s1857, 2
          %s1861 = smul.addr %s27, 32
          %s1862 = sadd.s32 %s1860, %s1861
          %s1863 = smul.addr %s1862, 8
          %s1864 = scalar_lea.hbm %s9, %s1863
          %s1865 = sshll.u32 %s1853, 4
          %s1866 = int_to_ptr.vmem [resolvable:$true] %s1865
          %s1867 = sshll.u32 %s1864, 4
          %s1868 = int_to_ptr.hbm [resolvable:$true] %s1867
          %1873 = dma.vmem_to_hbm [thread:$0]  %s1866, 2048, %s1868, %s1850, 128, 128, 8
        $region60: #{tpu_custom_call.1} parent=55 // pred_fallthru
          _
      $region56: #{tpu_custom_call.1} parent=5 // pred_fallthru
        _
      %p1874 = scmp.le.s32.totalorder 2, %s18
      // Predicated region
      $region61: #{tpu_custom_call.1} parent=5 // pred_check
        %p1875 = pneg %p1874
      $region62: #{tpu_custom_call.1} parent=5 // pred_check_branch
        %1877 = sbr.rel (%p1875) target = $region64
      $region63: #{tpu_custom_call.1} parent=5 // pred_region
        %s1878 = ssub.s32 %s18, 2
        // Predicated region
        $region65: #{tpu_custom_call.1} parent=63 // pred_check
          %p1879 = pneg %p255
        $region66: #{tpu_custom_call.1} parent=63 // pred_check_branch
          %1881 = sbr.rel (%p1879) target = $region68
        $region67: #{tpu_custom_call.1} parent=63 // pred_region
          %s1882 = sand.u32 %s240, 1
          %s1883 = scalar_lea.sflag [#allocation4], %s1882
          %s1884 = sand.u32 %s240, 1
          %s1885 = smul.addr %s1884, 128
          %s1886 = scalar_lea.vmem [#allocation3], %s1885
          %1888 = dma.done %s1883, 2048
        $region68: #{tpu_custom_call.1} parent=63 // pred_fallthru
          _
      $region64: #{tpu_custom_call.1} parent=5 // pred_fallthru
        _
    $region6: #{tpu_custom_call.1} parent=1 // loop_footer
      %s22 = sadd.s32 1, %s18
    $region7: #{tpu_custom_call.1} parent=1 // loop_footer_branch
      %17 = sbr.rel target = $region3
    $region8: #{tpu_custom_call.1} parent=1 // loop_exit
      _
    %1889 = vsyncpa [#allocation4], 1
    %s1890 = scalar_lea.sflag [#allocation4], 1
    %1891 = vsyncpa %s1890, 1

</llo_original>
